<compile_context>
chip_gen: v5e
topology: v5e:2x2
jax: 0.10.0
libtpu: 0.0.40
codegen_flags: <defaults>
</compile_context>

<pallas_src>
import jax
import jax.numpy as jnp
from jax.experimental import pallas as pl
from jax.experimental.pallas import tpu as pltpu


def _pick_row_tile(ho, wo, target_pixels=2048):
    """Largest divisor Th of Ho with Th*Wo <= target and (Th*Wo) % 8 == 0."""
    cands = [t for t in range(1, ho + 1)
             if ho % t == 0 and (t * wo) % 8 == 0 and t * wo <= target_pixels]
    return max(cands) if cands else ho


def _make_kernel(th, wo, cin, coutp):
    tpix = th * wo  # pooled pixels per row tile

    def kernel(planes_ref, w_ref, b_ref, out_ref):
        # planes_ref: (1, 4, Ho+1, Wo+1, Cin) bf16; plane p = hp*2 + wp holds
        #             x_pad[2*i + hp, 2*j + wp, :]  (2x2-parity de-interleaved input)
        # w_ref:      (9, Cin, Coutp) bf16, tap index = kh*3 + kw
        # b_ref:      (1, Coutp) f32
        # out_ref:    (1, Th*Wo, Coutp) f32, pooled rows [r*Th, (r+1)*Th)
        row0 = pl.program_id(1) * th

        acc = None  # (4*Th*Wo, Coutp) f32; rows grouped by pool position g = a*2 + b
        for kh in range(3):
            for kw in range(3):
                wins = []
                for a in (0, 1):          # pool-window row offset
                    for b in (0, 1):      # pool-window col offset
                        s, t = a + kh, b + kw
                        plane = (s % 2) * 2 + (t % 2)
                        wins.append(planes_ref[0, plane,
                                               pl.ds(row0 + s // 2, th),
                                               pl.ds(t // 2, wo), :])   # (Th, Wo, Cin)
                # one reshape per tap; group g occupies rows [g*tpix, (g+1)*tpix)
                lhs = jnp.concatenate(wins, axis=0).reshape(4 * tpix, cin)
                d = jnp.dot(lhs, w_ref[kh * 3 + kw],
                            preferred_element_type=jnp.float32)
                acc = d if acc is None else acc + d

        # 2x2 max-pool over the 4 position groups, then bias + ReLU once (exact).
        pooled = jnp.maximum(jnp.maximum(acc[:tpix], acc[tpix:2 * tpix]),
                             jnp.maximum(acc[2 * tpix:3 * tpix], acc[3 * tpix:]))
        out_ref[0] = jnp.maximum(pooled + b_ref[...], 0.0).astype(out_ref.dtype)

    return kernel


def conv_block_forward(x_nchw, weight, bias, *, compute_dtype=jnp.bfloat16,
                       target_tile_pixels=2048):
    """ConvBlock forward: Conv2d(3x3, pad=1, stride=1, bias) -> ReLU -> MaxPool2d(2,2)."""
    N, Cin, H, W = x_nchw.shape
    Cout, Cin_w, KH, KW = weight.shape
    assert Cin_w == Cin and KH == 3 and KW == 3, "kernel hard-codes 3x3, pad=1, stride=1"
    assert H % 2 == 0 and W % 2 == 0, "MaxPool2d(2,2) needs even H, W"
    Ho, Wo = H // 2, W // 2
    Hq, Wq = Ho + 1, Wo + 1
    P = Ho * Wo
    Coutp = ((Cout + 127) // 128) * 128          # lane-dense (unmasked) output stores

    # ---- glue (cheap, ~1x input bytes): pad=1 + 2x2-parity space-to-depth ----
    xp = jnp.pad(x_nchw, ((0, 0), (0, 0), (1, 1), (1, 1)))           # (N,Cin,H+2,W+2)
    planes = xp.reshape(N, Cin, Hq, 2, Wq, 2)
    planes = planes.transpose(0, 3, 5, 2, 4, 1)                      # (N,hp,wp,Hq,Wq,Cin)
    planes = planes.reshape(N, 4, Hq, Wq, Cin).astype(compute_dtype)

    # weights: (Cout,Cin,3,3) -> (kh,kw,Cin,Cout) -> (9,Cin,Coutp), zero-padded cols
    wmat = jnp.transpose(weight, (2, 3, 1, 0)).reshape(9, Cin, Cout)
    wmat = jnp.pad(wmat, ((0, 0), (0, 0), (0, Coutp - Cout))).astype(compute_dtype)
    brow = jnp.pad(bias.astype(jnp.float32).reshape(1, Cout),
                   ((0, 0), (0, Coutp - Cout)))

    Th = _pick_row_tile(Ho, Wo, target_tile_pixels)
    R = Ho // Th

    itemsize = jnp.dtype(compute_dtype).itemsize
    bytes_accessed = (N * 4 * Hq * Wq * Cin * itemsize          # image planes
                      + 9 * Cin * Coutp * itemsize              # weights
                      + Coutp * 4                               # bias
                      + N * P * Coutp * 4)                      # output
    cost = pl.CostEstimate(flops=2 * N * H * W * 9 * Cin * Cout,
                           transcendentals=0,
                           bytes_accessed=bytes_accessed)

    out = pl.pallas_call(
        _make_kernel(Th, Wo, Cin, Coutp),
        out_shape=jax.ShapeDtypeStruct((N, P, Coutp), jnp.float32),
        grid_spec=pltpu.PrefetchScalarGridSpec(
            num_scalar_prefetch=0,
            grid=(N, R),
            in_specs=[
                # full padded image: index constant along r -> fetched once per n,
                # stays VMEM-resident while the row tiles stream through.
                pl.BlockSpec((1, 4, Hq, Wq, Cin), lambda n, r: (n, 0, 0, 0, 0)),
                pl.BlockSpec((9, Cin, Coutp), lambda n, r: (0, 0, 0)),
                pl.BlockSpec((1, Coutp), lambda n, r: (0, 0)),
            ],
            out_specs=pl.BlockSpec((1, Th * Wo, Coutp), lambda n, r: (n, r, 0)),
        ),
        compiler_params=pltpu.CompilerParams(
            dimension_semantics=("parallel", "parallel"),
            vmem_limit_bytes=48 * 1024 * 1024,
        ),
        cost_estimate=cost,
    )(planes, wmat, brow)

    out = out[:, :, :Cout].reshape(N, Ho, Wo, Cout)
    return jnp.transpose(out, (0, 3, 1, 2))                          # NCHW pooled output


def _reference(x, weight, bias):
    y = jax.lax.conv_general_dilated(
        x, weight, window_strides=(1, 1), padding=((1, 1), (1, 1)),
        dimension_numbers=("NCHW", "OIHW", "NCHW"),
        precision=jax.lax.Precision.HIGHEST)
    y = jax.nn.relu(y + bias[None, :, None, None])
    y = jax.lax.reduce_window(y, -jnp.inf, jax.lax.max,
                              (1, 1, 2, 2), (1, 1, 2, 2), "VALID")
    return y


if __name__ == "__main__":
    # ConvBlock(in_channels=4, out_channels=8, pooling=True)
    N, Cin, H, W = 2, 4, 16, 16
    Cout, KH, KW = 8, 3, 3

    key = jax.random.PRNGKey(0)
    kx, kw, kb = jax.random.split(key, 3)
    x = jax.random.normal(kx, (N, Cin, H, W), jnp.float32)

    # deterministic Conv2d-style init (kaiming-uniform-ish bounds)
    fan_in = Cin * KH * KW
    bound = 1.0 / (fan_in ** 0.5)
    weight = jax.random.uniform(kw, (Cout, Cin, KH, KW), jnp.float32, -bound, bound)
    bias = jax.random.uniform(kb, (Cout,), jnp.float32, -bound, bound)

    y = conv_block_forward(x, weight, bias)
    jax.block_until_ready(y)

    # The kernel feeds bf16 to the MXU (f32 accumulation), so compare against the
    # f32 reference evaluated on the same bf16-rounded activations/weights.
    x_q = x.astype(jnp.bfloat16).astype(jnp.float32)
    w_q = weight.astype(jnp.bfloat16).astype(jnp.float32)
    y_ref = _reference(x_q, w_q, bias)

    assert y.shape == (N, Cout, H // 2, W // 2)
    assert jnp.allclose(y, y_ref, atol=1e-3, rtol=1e-3), "mismatch vs XLA reference"
    print("KERNEL_OK")
</pallas_src>

<mosaic_0001>
module attributes {stable_mosaic.version = 11 : i64} {
  func.func @kernel(%arg0: i32, %arg1: i32, %arg2: memref<1x4x9x9x4xbf16, #tpu.memory_space<vmem>>, %arg3: memref<9x4x128xbf16, #tpu.memory_space<vmem>>, %arg4: memref<1x128xf32, #tpu.memory_space<vmem>>, %arg5: memref<1x64x128xf32, #tpu.memory_space<vmem>>) attributes {dimension_semantics = [#tpu.dimension_semantics<parallel>, #tpu.dimension_semantics<parallel>], iteration_bounds = array<i64: 2, 1>, scalar_prefetch = 0 : i64, scratch_operands = 0 : i64, tpu.core_type = #tpu.core_type<tc>, window_params = [{transform_indices = @transform_0, window_bounds = array<i64: 1, 4, 9, 9, 4>}, {pipeline_mode = #tpu.pipeline_mode<synchronous>, transform_indices = @transform_1, window_bounds = array<i64: 9, 4, 128>}, {pipeline_mode = #tpu.pipeline_mode<synchronous>, transform_indices = @transform_2, window_bounds = array<i64: 1, 128>}, {transform_indices = @transform_3, window_bounds = array<i64: 1, 64, 128>}]} {
    %c8_i32 = arith.constant 8 : i32
    %0 = arith.muli %arg1, %c8_i32 : i32
    %c0_i32 = arith.constant 0 : i32
    %1 = arith.addi %0, %c0_i32 : i32
    %c0 = arith.constant 0 : index
    %c0_0 = arith.constant 0 : index
    %2 = arith.index_cast %1 : i32 to index
    %c0_1 = arith.constant 0 : index
    %c0_2 = arith.constant 0 : index
    %3 = vector.load %arg2[%c0, %c0_0, %2, %c0_1, %c0_2] : memref<1x4x9x9x4xbf16, #tpu.memory_space<vmem>>, vector<1x1x8x8x4xbf16>
    %4 = vector.shape_cast %3 : vector<1x1x8x8x4xbf16> to vector<8x8x4xbf16>
    %c0_i32_3 = arith.constant 0 : i32
    %5 = arith.addi %0, %c0_i32_3 : i32
    %c0_4 = arith.constant 0 : index
    %c1 = arith.constant 1 : index
    %6 = arith.index_cast %5 : i32 to index
    %c0_5 = arith.constant 0 : index
    %c0_6 = arith.constant 0 : index
    %7 = vector.load %arg2[%c0_4, %c1, %6, %c0_5, %c0_6] : memref<1x4x9x9x4xbf16, #tpu.memory_space<vmem>>, vector<1x1x8x8x4xbf16>
    %8 = vector.shape_cast %7 : vector<1x1x8x8x4xbf16> to vector<8x8x4xbf16>
    %c0_i32_7 = arith.constant 0 : i32
    %9 = arith.addi %0, %c0_i32_7 : i32
    %c0_8 = arith.constant 0 : index
    %c2 = arith.constant 2 : index
    %10 = arith.index_cast %9 : i32 to index
    %c0_9 = arith.constant 0 : index
    %c0_10 = arith.constant 0 : index
    %11 = vector.load %arg2[%c0_8, %c2, %10, %c0_9, %c0_10] : memref<1x4x9x9x4xbf16, #tpu.memory_space<vmem>>, vector<1x1x8x8x4xbf16>
    %12 = vector.shape_cast %11 : vector<1x1x8x8x4xbf16> to vector<8x8x4xbf16>
    %c0_i32_11 = arith.constant 0 : i32
    %13 = arith.addi %0, %c0_i32_11 : i32
    %c0_12 = arith.constant 0 : index
    %c3 = arith.constant 3 : index
    %14 = arith.index_cast %13 : i32 to index
    %c0_13 = arith.constant 0 : index
    %c0_14 = arith.constant 0 : index
    %15 = vector.load %arg2[%c0_12, %c3, %14, %c0_13, %c0_14] : memref<1x4x9x9x4xbf16, #tpu.memory_space<vmem>>, vector<1x1x8x8x4xbf16>
    %16 = vector.shape_cast %15 : vector<1x1x8x8x4xbf16> to vector<8x8x4xbf16>
    %17 = tpu.concatenate %4, %8, %12, %16 in 0 : vector<8x8x4xbf16>, vector<8x8x4xbf16>, vector<8x8x4xbf16>, vector<8x8x4xbf16> -> vector<32x8x4xbf16>
    %18 = vector.shape_cast %17 : vector<32x8x4xbf16> to vector<256x4xbf16>
    %c0_15 = arith.constant 0 : index
    %c0_16 = arith.constant 0 : index
    %c0_17 = arith.constant 0 : index
    %19 = vector.load %arg3[%c0_15, %c0_16, %c0_17] : memref<9x4x128xbf16, #tpu.memory_space<vmem>>, vector<1x4x128xbf16>
    %20 = vector.shape_cast %19 : vector<1x4x128xbf16> to vector<4x128xbf16>
    %cst = arith.constant dense<0.000000e+00> : vector<256x128xf32>
    %21 = tpu.matmul %18, %20, %cst {dimension_numbers = #tpu.dot_dimension_numbers<[1], [0], [0], [1], [0, 0, 1, 1], [], []>} : vector<256x4xbf16>, vector<4x128xbf16>, vector<256x128xf32> -> vector<256x128xf32>
    %c0_i32_18 = arith.constant 0 : i32
    %22 = arith.addi %0, %c0_i32_18 : i32
    %c0_19 = arith.constant 0 : index
    %c1_20 = arith.constant 1 : index
    %23 = arith.index_cast %22 : i32 to index
    %c0_21 = arith.constant 0 : index
    %c0_22 = arith.constant 0 : index
    %24 = vector.load %arg2[%c0_19, %c1_20, %23, %c0_21, %c0_22] : memref<1x4x9x9x4xbf16, #tpu.memory_space<vmem>>, vector<1x1x8x8x4xbf16>
    %25 = vector.shape_cast %24 : vector<1x1x8x8x4xbf16> to vector<8x8x4xbf16>
    %c0_i32_23 = arith.constant 0 : i32
    %26 = arith.addi %0, %c0_i32_23 : i32
    %c0_24 = arith.constant 0 : index
    %c0_25 = arith.constant 0 : index
    %27 = arith.index_cast %26 : i32 to index
    %c1_26 = arith.constant 1 : index
    %c0_27 = arith.constant 0 : index
    %28 = vector.load %arg2[%c0_24, %c0_25, %27, %c1_26, %c0_27] : memref<1x4x9x9x4xbf16, #tpu.memory_space<vmem>>, vector<1x1x8x8x4xbf16>
    %29 = vector.shape_cast %28 : vector<1x1x8x8x4xbf16> to vector<8x8x4xbf16>
    %c0_i32_28 = arith.constant 0 : i32
    %30 = arith.addi %0, %c0_i32_28 : i32
    %c0_29 = arith.constant 0 : index
    %c3_30 = arith.constant 3 : index
    %31 = arith.index_cast %30 : i32 to index
    %c0_31 = arith.constant 0 : index
    %c0_32 = arith.constant 0 : index
    %32 = vector.load %arg2[%c0_29, %c3_30, %31, %c0_31, %c0_32] : memref<1x4x9x9x4xbf16, #tpu.memory_space<vmem>>, vector<1x1x8x8x4xbf16>
    %33 = vector.shape_cast %32 : vector<1x1x8x8x4xbf16> to vector<8x8x4xbf16>
    %c0_i32_33 = arith.constant 0 : i32
    %34 = arith.addi %0, %c0_i32_33 : i32
    %c0_34 = arith.constant 0 : index
    %c2_35 = arith.constant 2 : index
    %35 = arith.index_cast %34 : i32 to index
    %c1_36 = arith.constant 1 : index
    %c0_37 = arith.constant 0 : index
    %36 = vector.load %arg2[%c0_34, %c2_35, %35, %c1_36, %c0_37] : memref<1x4x9x9x4xbf16, #tpu.memory_space<vmem>>, vector<1x1x8x8x4xbf16>
    %37 = vector.shape_cast %36 : vector<1x1x8x8x4xbf16> to vector<8x8x4xbf16>
    %38 = tpu.concatenate %25, %29, %33, %37 in 0 : vector<8x8x4xbf16>, vector<8x8x4xbf16>, vector<8x8x4xbf16>, vector<8x8x4xbf16> -> vector<32x8x4xbf16>
    %39 = vector.shape_cast %38 : vector<32x8x4xbf16> to vector<256x4xbf16>
    %c1_38 = arith.constant 1 : index
    %c0_39 = arith.constant 0 : index
    %c0_40 = arith.constant 0 : index
    %40 = vector.load %arg3[%c1_38, %c0_39, %c0_40] : memref<9x4x128xbf16, #tpu.memory_space<vmem>>, vector<1x4x128xbf16>
    %41 = vector.shape_cast %40 : vector<1x4x128xbf16> to vector<4x128xbf16>
    %cst_41 = arith.constant dense<0.000000e+00> : vector<256x128xf32>
    %42 = tpu.matmul %39, %41, %cst_41 {dimension_numbers = #tpu.dot_dimension_numbers<[1], [0], [0], [1], [0, 0, 1, 1], [], []>} : vector<256x4xbf16>, vector<4x128xbf16>, vector<256x128xf32> -> vector<256x128xf32>
    %43 = arith.addf %21, %42 : vector<256x128xf32>
    %c0_i32_42 = arith.constant 0 : i32
    %44 = arith.addi %0, %c0_i32_42 : i32
    %c0_43 = arith.constant 0 : index
    %c0_44 = arith.constant 0 : index
    %45 = arith.index_cast %44 : i32 to index
    %c1_45 = arith.constant 1 : index
    %c0_46 = arith.constant 0 : index
    %46 = vector.load %arg2[%c0_43, %c0_44, %45, %c1_45, %c0_46] : memref<1x4x9x9x4xbf16, #tpu.memory_space<vmem>>, vector<1x1x8x8x4xbf16>
    %47 = vector.shape_cast %46 : vector<1x1x8x8x4xbf16> to vector<8x8x4xbf16>
    %c0_i32_47 = arith.constant 0 : i32
    %48 = arith.addi %0, %c0_i32_47 : i32
    %c0_48 = arith.constant 0 : index
    %c1_49 = arith.constant 1 : index
    %49 = arith.index_cast %48 : i32 to index
    %c1_50 = arith.constant 1 : index
    %c0_51 = arith.constant 0 : index
    %50 = vector.load %arg2[%c0_48, %c1_49, %49, %c1_50, %c0_51] : memref<1x4x9x9x4xbf16, #tpu.memory_space<vmem>>, vector<1x1x8x8x4xbf16>
    %51 = vector.shape_cast %50 : vector<1x1x8x8x4xbf16> to vector<8x8x4xbf16>
    %c0_i32_52 = arith.constant 0 : i32
    %52 = arith.addi %0, %c0_i32_52 : i32
    %c0_53 = arith.constant 0 : index
    %c2_54 = arith.constant 2 : index
    %53 = arith.index_cast %52 : i32 to index
    %c1_55 = arith.constant 1 : index
    %c0_56 = arith.constant 0 : index
    %54 = vector.load %arg2[%c0_53, %c2_54, %53, %c1_55, %c0_56] : memref<1x4x9x9x4xbf16, #tpu.memory_space<vmem>>, vector<1x1x8x8x4xbf16>
    %55 = vector.shape_cast %54 : vector<1x1x8x8x4xbf16> to vector<8x8x4xbf16>
    %c0_i32_57 = arith.constant 0 : i32
    %56 = arith.addi %0, %c0_i32_57 : i32
    %c0_58 = arith.constant 0 : index
    %c3_59 = arith.constant 3 : index
    %57 = arith.index_cast %56 : i32 to index
    %c1_60 = arith.constant 1 : index
    %c0_61 = arith.constant 0 : index
    %58 = vector.load %arg2[%c0_58, %c3_59, %57, %c1_60, %c0_61] : memref<1x4x9x9x4xbf16, #tpu.memory_space<vmem>>, vector<1x1x8x8x4xbf16>
    %59 = vector.shape_cast %58 : vector<1x1x8x8x4xbf16> to vector<8x8x4xbf16>
    %60 = tpu.concatenate %47, %51, %55, %59 in 0 : vector<8x8x4xbf16>, vector<8x8x4xbf16>, vector<8x8x4xbf16>, vector<8x8x4xbf16> -> vector<32x8x4xbf16>
    %61 = vector.shape_cast %60 : vector<32x8x4xbf16> to vector<256x4xbf16>
    %c2_62 = arith.constant 2 : index
    %c0_63 = arith.constant 0 : index
    %c0_64 = arith.constant 0 : index
    %62 = vector.load %arg3[%c2_62, %c0_63, %c0_64] : memref<9x4x128xbf16, #tpu.memory_space<vmem>>, vector<1x4x128xbf16>
    %63 = vector.shape_cast %62 : vector<1x4x128xbf16> to vector<4x128xbf16>
    %cst_65 = arith.constant dense<0.000000e+00> : vector<256x128xf32>
    %64 = tpu.matmul %61, %63, %cst_65 {dimension_numbers = #tpu.dot_dimension_numbers<[1], [0], [0], [1], [0, 0, 1, 1], [], []>} : vector<256x4xbf16>, vector<4x128xbf16>, vector<256x128xf32> -> vector<256x128xf32>
    %65 = arith.addf %43, %64 : vector<256x128xf32>
    %c0_i32_66 = arith.constant 0 : i32
    %66 = arith.addi %0, %c0_i32_66 : i32
    %c0_67 = arith.constant 0 : index
    %c2_68 = arith.constant 2 : index
    %67 = arith.index_cast %66 : i32 to index
    %c0_69 = arith.constant 0 : index
    %c0_70 = arith.constant 0 : index
    %68 = vector.load %arg2[%c0_67, %c2_68, %67, %c0_69, %c0_70] : memref<1x4x9x9x4xbf16, #tpu.memory_space<vmem>>, vector<1x1x8x8x4xbf16>
    %69 = vector.shape_cast %68 : vector<1x1x8x8x4xbf16> to vector<8x8x4xbf16>
    %c0_i32_71 = arith.constant 0 : i32
    %70 = arith.addi %0, %c0_i32_71 : i32
    %c0_72 = arith.constant 0 : index
    %c3_73 = arith.constant 3 : index
    %71 = arith.index_cast %70 : i32 to index
    %c0_74 = arith.constant 0 : index
    %c0_75 = arith.constant 0 : index
    %72 = vector.load %arg2[%c0_72, %c3_73, %71, %c0_74, %c0_75] : memref<1x4x9x9x4xbf16, #tpu.memory_space<vmem>>, vector<1x1x8x8x4xbf16>
    %73 = vector.shape_cast %72 : vector<1x1x8x8x4xbf16> to vector<8x8x4xbf16>
    %c1_i32 = arith.constant 1 : i32
    %74 = arith.addi %0, %c1_i32 : i32
    %c0_76 = arith.constant 0 : index
    %c0_77 = arith.constant 0 : index
    %75 = arith.index_cast %74 : i32 to index
    %c0_78 = arith.constant 0 : index
    %c0_79 = arith.constant 0 : index
    %76 = vector.load %arg2[%c0_76, %c0_77, %75, %c0_78, %c0_79] : memref<1x4x9x9x4xbf16, #tpu.memory_space<vmem>>, vector<1x1x8x8x4xbf16>
    %77 = vector.shape_cast %76 : vector<1x1x8x8x4xbf16> to vector<8x8x4xbf16>
    %c1_i32_80 = arith.constant 1 : i32
    %78 = arith.addi %0, %c1_i32_80 : i32
    %c0_81 = arith.constant 0 : index
    %c1_82 = arith.constant 1 : index
    %79 = arith.index_cast %78 : i32 to index
    %c0_83 = arith.constant 0 : index
    %c0_84 = arith.constant 0 : index
    %80 = vector.load %arg2[%c0_81, %c1_82, %79, %c0_83, %c0_84] : memref<1x4x9x9x4xbf16, #tpu.memory_space<vmem>>, vector<1x1x8x8x4xbf16>
    %81 = vector.shape_cast %80 : vector<1x1x8x8x4xbf16> to vector<8x8x4xbf16>
    %82 = tpu.concatenate %69, %73, %77, %81 in 0 : vector<8x8x4xbf16>, vector<8x8x4xbf16>, vector<8x8x4xbf16>, vector<8x8x4xbf16> -> vector<32x8x4xbf16>
    %83 = vector.shape_cast %82 : vector<32x8x4xbf16> to vector<256x4xbf16>
    %c3_85 = arith.constant 3 : index
    %c0_86 = arith.constant 0 : index
    %c0_87 = arith.constant 0 : index
    %84 = vector.load %arg3[%c3_85, %c0_86, %c0_87] : memref<9x4x128xbf16, #tpu.memory_space<vmem>>, vector<1x4x128xbf16>
    %85 = vector.shape_cast %84 : vector<1x4x128xbf16> to vector<4x128xbf16>
    %cst_88 = arith.constant dense<0.000000e+00> : vector<256x128xf32>
    %86 = tpu.matmul %83, %85, %cst_88 {dimension_numbers = #tpu.dot_dimension_numbers<[1], [0], [0], [1], [0, 0, 1, 1], [], []>} : vector<256x4xbf16>, vector<4x128xbf16>, vector<256x128xf32> -> vector<256x128xf32>
    %87 = arith.addf %65, %86 : vector<256x128xf32>
    %c0_i32_89 = arith.constant 0 : i32
    %88 = arith.addi %0, %c0_i32_89 : i32
    %c0_90 = arith.constant 0 : index
    %c3_91 = arith.constant 3 : index
    %89 = arith.index_cast %88 : i32 to index
    %c0_92 = arith.constant 0 : index
    %c0_93 = arith.constant 0 : index
    %90 = vector.load %arg2[%c0_90, %c3_91, %89, %c0_92, %c0_93] : memref<1x4x9x9x4xbf16, #tpu.memory_space<vmem>>, vector<1x1x8x8x4xbf16>
    %91 = vector.shape_cast %90 : vector<1x1x8x8x4xbf16> to vector<8x8x4xbf16>
    %c0_i32_94 = arith.constant 0 : i32
    %92 = arith.addi %0, %c0_i32_94 : i32
    %c0_95 = arith.constant 0 : index
    %c2_96 = arith.constant 2 : index
    %93 = arith.index_cast %92 : i32 to index
    %c1_97 = arith.constant 1 : index
    %c0_98 = arith.constant 0 : index
    %94 = vector.load %arg2[%c0_95, %c2_96, %93, %c1_97, %c0_98] : memref<1x4x9x9x4xbf16, #tpu.memory_space<vmem>>, vector<1x1x8x8x4xbf16>
    %95 = vector.shape_cast %94 : vector<1x1x8x8x4xbf16> to vector<8x8x4xbf16>
    %c1_i32_99 = arith.constant 1 : i32
    %96 = arith.addi %0, %c1_i32_99 : i32
    %c0_100 = arith.constant 0 : index
    %c1_101 = arith.constant 1 : index
    %97 = arith.index_cast %96 : i32 to index
    %c0_102 = arith.constant 0 : index
    %c0_103 = arith.constant 0 : index
    %98 = vector.load %arg2[%c0_100, %c1_101, %97, %c0_102, %c0_103] : memref<1x4x9x9x4xbf16, #tpu.memory_space<vmem>>, vector<1x1x8x8x4xbf16>
    %99 = vector.shape_cast %98 : vector<1x1x8x8x4xbf16> to vector<8x8x4xbf16>
    %c1_i32_104 = arith.constant 1 : i32
    %100 = arith.addi %0, %c1_i32_104 : i32
    %c0_105 = arith.constant 0 : index
    %c0_106 = arith.constant 0 : index
    %101 = arith.index_cast %100 : i32 to index
    %c1_107 = arith.constant 1 : index
    %c0_108 = arith.constant 0 : index
    %102 = vector.load %arg2[%c0_105, %c0_106, %101, %c1_107, %c0_108] : memref<1x4x9x9x4xbf16, #tpu.memory_space<vmem>>, vector<1x1x8x8x4xbf16>
    %103 = vector.shape_cast %102 : vector<1x1x8x8x4xbf16> to vector<8x8x4xbf16>
    %104 = tpu.concatenate %91, %95, %99, %103 in 0 : vector<8x8x4xbf16>, vector<8x8x4xbf16>, vector<8x8x4xbf16>, vector<8x8x4xbf16> -> vector<32x8x4xbf16>
    %105 = vector.shape_cast %104 : vector<32x8x4xbf16> to vector<256x4xbf16>
    %c4 = arith.constant 4 : index
    %c0_109 = arith.constant 0 : index
    %c0_110 = arith.constant 0 : index
    %106 = vector.load %arg3[%c4, %c0_109, %c0_110] : memref<9x4x128xbf16, #tpu.memory_space<vmem>>, vector<1x4x128xbf16>
    %107 = vector.shape_cast %106 : vector<1x4x128xbf16> to vector<4x128xbf16>
    %cst_111 = arith.constant dense<0.000000e+00> : vector<256x128xf32>
    %108 = tpu.matmul %105, %107, %cst_111 {dimension_numbers = #tpu.dot_dimension_numbers<[1], [0], [0], [1], [0, 0, 1, 1], [], []>} : vector<256x4xbf16>, vector<4x128xbf16>, vector<256x128xf32> -> vector<256x128xf32>
    %109 = arith.addf %87, %108 : vector<256x128xf32>
    %c0_i32_112 = arith.constant 0 : i32
    %110 = arith.addi %0, %c0_i32_112 : i32
    %c0_113 = arith.constant 0 : index
    %c2_114 = arith.constant 2 : index
    %111 = arith.index_cast %110 : i32 to index
    %c1_115 = arith.constant 1 : index
    %c0_116 = arith.constant 0 : index
    %112 = vector.load %arg2[%c0_113, %c2_114, %111, %c1_115, %c0_116] : memref<1x4x9x9x4xbf16, #tpu.memory_space<vmem>>, vector<1x1x8x8x4xbf16>
    %113 = vector.shape_cast %112 : vector<1x1x8x8x4xbf16> to vector<8x8x4xbf16>
    %c0_i32_117 = arith.constant 0 : i32
    %114 = arith.addi %0, %c0_i32_117 : i32
    %c0_118 = arith.constant 0 : index
    %c3_119 = arith.constant 3 : index
    %115 = arith.index_cast %114 : i32 to index
    %c1_120 = arith.constant 1 : index
    %c0_121 = arith.constant 0 : index
    %116 = vector.load %arg2[%c0_118, %c3_119, %115, %c1_120, %c0_121] : memref<1x4x9x9x4xbf16, #tpu.memory_space<vmem>>, vector<1x1x8x8x4xbf16>
    %117 = vector.shape_cast %116 : vector<1x1x8x8x4xbf16> to vector<8x8x4xbf16>
    %c1_i32_122 = arith.constant 1 : i32
    %118 = arith.addi %0, %c1_i32_122 : i32
    %c0_123 = arith.constant 0 : index
    %c0_124 = arith.constant 0 : index
    %119 = arith.index_cast %118 : i32 to index
    %c1_125 = arith.constant 1 : index
    %c0_126 = arith.constant 0 : index
    %120 = vector.load %arg2[%c0_123, %c0_124, %119, %c1_125, %c0_126] : memref<1x4x9x9x4xbf16, #tpu.memory_space<vmem>>, vector<1x1x8x8x4xbf16>
    %121 = vector.shape_cast %120 : vector<1x1x8x8x4xbf16> to vector<8x8x4xbf16>
    %c1_i32_127 = arith.constant 1 : i32
    %122 = arith.addi %0, %c1_i32_127 : i32
    %c0_128 = arith.constant 0 : index
    %c1_129 = arith.constant 1 : index
    %123 = arith.index_cast %122 : i32 to index
    %c1_130 = arith.constant 1 : index
    %c0_131 = arith.constant 0 : index
    %124 = vector.load %arg2[%c0_128, %c1_129, %123, %c1_130, %c0_131] : memref<1x4x9x9x4xbf16, #tpu.memory_space<vmem>>, vector<1x1x8x8x4xbf16>
    %125 = vector.shape_cast %124 : vector<1x1x8x8x4xbf16> to vector<8x8x4xbf16>
    %126 = tpu.concatenate %113, %117, %121, %125 in 0 : vector<8x8x4xbf16>, vector<8x8x4xbf16>, vector<8x8x4xbf16>, vector<8x8x4xbf16> -> vector<32x8x4xbf16>
    %127 = vector.shape_cast %126 : vector<32x8x4xbf16> to vector<256x4xbf16>
    %c5 = arith.constant 5 : index
    %c0_132 = arith.constant 0 : index
    %c0_133 = arith.constant 0 : index
    %128 = vector.load %arg3[%c5, %c0_132, %c0_133] : memref<9x4x128xbf16, #tpu.memory_space<vmem>>, vector<1x4x128xbf16>
    %129 = vector.shape_cast %128 : vector<1x4x128xbf16> to vector<4x128xbf16>
    %cst_134 = arith.constant dense<0.000000e+00> : vector<256x128xf32>
    %130 = tpu.matmul %127, %129, %cst_134 {dimension_numbers = #tpu.dot_dimension_numbers<[1], [0], [0], [1], [0, 0, 1, 1], [], []>} : vector<256x4xbf16>, vector<4x128xbf16>, vector<256x128xf32> -> vector<256x128xf32>
    %131 = arith.addf %109, %130 : vector<256x128xf32>
    %c1_i32_135 = arith.constant 1 : i32
    %132 = arith.addi %0, %c1_i32_135 : i32
    %c0_136 = arith.constant 0 : index
    %c0_137 = arith.constant 0 : index
    %133 = arith.index_cast %132 : i32 to index
    %c0_138 = arith.constant 0 : index
    %c0_139 = arith.constant 0 : index
    %134 = vector.load %arg2[%c0_136, %c0_137, %133, %c0_138, %c0_139] : memref<1x4x9x9x4xbf16, #tpu.memory_space<vmem>>, vector<1x1x8x8x4xbf16>
    %135 = vector.shape_cast %134 : vector<1x1x8x8x4xbf16> to vector<8x8x4xbf16>
    %c1_i32_140 = arith.constant 1 : i32
    %136 = arith.addi %0, %c1_i32_140 : i32
    %c0_141 = arith.constant 0 : index
    %c1_142 = arith.constant 1 : index
    %137 = arith.index_cast %136 : i32 to index
    %c0_143 = arith.constant 0 : index
    %c0_144 = arith.constant 0 : index
    %138 = vector.load %arg2[%c0_141, %c1_142, %137, %c0_143, %c0_144] : memref<1x4x9x9x4xbf16, #tpu.memory_space<vmem>>, vector<1x1x8x8x4xbf16>
    %139 = vector.shape_cast %138 : vector<1x1x8x8x4xbf16> to vector<8x8x4xbf16>
    %c1_i32_145 = arith.constant 1 : i32
    %140 = arith.addi %0, %c1_i32_145 : i32
    %c0_146 = arith.constant 0 : index
    %c2_147 = arith.constant 2 : index
    %141 = arith.index_cast %140 : i32 to index
    %c0_148 = arith.constant 0 : index
    %c0_149 = arith.constant 0 : index
    %142 = vector.load %arg2[%c0_146, %c2_147, %141, %c0_148, %c0_149] : memref<1x4x9x9x4xbf16, #tpu.memory_space<vmem>>, vector<1x1x8x8x4xbf16>
    %143 = vector.shape_cast %142 : vector<1x1x8x8x4xbf16> to vector<8x8x4xbf16>
    %c1_i32_150 = arith.constant 1 : i32
    %144 = arith.addi %0, %c1_i32_150 : i32
    %c0_151 = arith.constant 0 : index
    %c3_152 = arith.constant 3 : index
    %145 = arith.index_cast %144 : i32 to index
    %c0_153 = arith.constant 0 : index
    %c0_154 = arith.constant 0 : index
    %146 = vector.load %arg2[%c0_151, %c3_152, %145, %c0_153, %c0_154] : memref<1x4x9x9x4xbf16, #tpu.memory_space<vmem>>, vector<1x1x8x8x4xbf16>
    %147 = vector.shape_cast %146 : vector<1x1x8x8x4xbf16> to vector<8x8x4xbf16>
    %148 = tpu.concatenate %135, %139, %143, %147 in 0 : vector<8x8x4xbf16>, vector<8x8x4xbf16>, vector<8x8x4xbf16>, vector<8x8x4xbf16> -> vector<32x8x4xbf16>
    %149 = vector.shape_cast %148 : vector<32x8x4xbf16> to vector<256x4xbf16>
    %c6 = arith.constant 6 : index
    %c0_155 = arith.constant 0 : index
    %c0_156 = arith.constant 0 : index
    %150 = vector.load %arg3[%c6, %c0_155, %c0_156] : memref<9x4x128xbf16, #tpu.memory_space<vmem>>, vector<1x4x128xbf16>
    %151 = vector.shape_cast %150 : vector<1x4x128xbf16> to vector<4x128xbf16>
    %cst_157 = arith.constant dense<0.000000e+00> : vector<256x128xf32>
    %152 = tpu.matmul %149, %151, %cst_157 {dimension_numbers = #tpu.dot_dimension_numbers<[1], [0], [0], [1], [0, 0, 1, 1], [], []>} : vector<256x4xbf16>, vector<4x128xbf16>, vector<256x128xf32> -> vector<256x128xf32>
    %153 = arith.addf %131, %152 : vector<256x128xf32>
    %c1_i32_158 = arith.constant 1 : i32
    %154 = arith.addi %0, %c1_i32_158 : i32
    %c0_159 = arith.constant 0 : index
    %c1_160 = arith.constant 1 : index
    %155 = arith.index_cast %154 : i32 to index
    %c0_161 = arith.constant 0 : index
    %c0_162 = arith.constant 0 : index
    %156 = vector.load %arg2[%c0_159, %c1_160, %155, %c0_161, %c0_162] : memref<1x4x9x9x4xbf16, #tpu.memory_space<vmem>>, vector<1x1x8x8x4xbf16>
    %157 = vector.shape_cast %156 : vector<1x1x8x8x4xbf16> to vector<8x8x4xbf16>
    %c1_i32_163 = arith.constant 1 : i32
    %158 = arith.addi %0, %c1_i32_163 : i32
    %c0_164 = arith.constant 0 : index
    %c0_165 = arith.constant 0 : index
    %159 = arith.index_cast %158 : i32 to index
    %c1_166 = arith.constant 1 : index
    %c0_167 = arith.constant 0 : index
    %160 = vector.load %arg2[%c0_164, %c0_165, %159, %c1_166, %c0_167] : memref<1x4x9x9x4xbf16, #tpu.memory_space<vmem>>, vector<1x1x8x8x4xbf16>
    %161 = vector.shape_cast %160 : vector<1x1x8x8x4xbf16> to vector<8x8x4xbf16>
    %c1_i32_168 = arith.constant 1 : i32
    %162 = arith.addi %0, %c1_i32_168 : i32
    %c0_169 = arith.constant 0 : index
    %c3_170 = arith.constant 3 : index
    %163 = arith.index_cast %162 : i32 to index
    %c0_171 = arith.constant 0 : index
    %c0_172 = arith.constant 0 : index
    %164 = vector.load %arg2[%c0_169, %c3_170, %163, %c0_171, %c0_172] : memref<1x4x9x9x4xbf16, #tpu.memory_space<vmem>>, vector<1x1x8x8x4xbf16>
    %165 = vector.shape_cast %164 : vector<1x1x8x8x4xbf16> to vector<8x8x4xbf16>
    %c1_i32_173 = arith.constant 1 : i32
    %166 = arith.addi %0, %c1_i32_173 : i32
    %c0_174 = arith.constant 0 : index
    %c2_175 = arith.constant 2 : index
    %167 = arith.index_cast %166 : i32 to index
    %c1_176 = arith.constant 1 : index
    %c0_177 = arith.constant 0 : index
    %168 = vector.load %arg2[%c0_174, %c2_175, %167, %c1_176, %c0_177] : memref<1x4x9x9x4xbf16, #tpu.memory_space<vmem>>, vector<1x1x8x8x4xbf16>
    %169 = vector.shape_cast %168 : vector<1x1x8x8x4xbf16> to vector<8x8x4xbf16>
    %170 = tpu.concatenate %157, %161, %165, %169 in 0 : vector<8x8x4xbf16>, vector<8x8x4xbf16>, vector<8x8x4xbf16>, vector<8x8x4xbf16> -> vector<32x8x4xbf16>
    %171 = vector.shape_cast %170 : vector<32x8x4xbf16> to vector<256x4xbf16>
    %c7 = arith.constant 7 : index
    %c0_178 = arith.constant 0 : index
    %c0_179 = arith.constant 0 : index
    %172 = vector.load %arg3[%c7, %c0_178, %c0_179] : memref<9x4x128xbf16, #tpu.memory_space<vmem>>, vector<1x4x128xbf16>
    %173 = vector.shape_cast %172 : vector<1x4x128xbf16> to vector<4x128xbf16>
    %cst_180 = arith.constant dense<0.000000e+00> : vector<256x128xf32>
    %174 = tpu.matmul %171, %173, %cst_180 {dimension_numbers = #tpu.dot_dimension_numbers<[1], [0], [0], [1], [0, 0, 1, 1], [], []>} : vector<256x4xbf16>, vector<4x128xbf16>, vector<256x128xf32> -> vector<256x128xf32>
    %175 = arith.addf %153, %174 : vector<256x128xf32>
    %c1_i32_181 = arith.constant 1 : i32
    %176 = arith.addi %0, %c1_i32_181 : i32
    %c0_182 = arith.constant 0 : index
    %c0_183 = arith.constant 0 : index
    %177 = arith.index_cast %176 : i32 to index
    %c1_184 = arith.constant 1 : index
    %c0_185 = arith.constant 0 : index
    %178 = vector.load %arg2[%c0_182, %c0_183, %177, %c1_184, %c0_185] : memref<1x4x9x9x4xbf16, #tpu.memory_space<vmem>>, vector<1x1x8x8x4xbf16>
    %179 = vector.shape_cast %178 : vector<1x1x8x8x4xbf16> to vector<8x8x4xbf16>
    %c1_i32_186 = arith.constant 1 : i32
    %180 = arith.addi %0, %c1_i32_186 : i32
    %c0_187 = arith.constant 0 : index
    %c1_188 = arith.constant 1 : index
    %181 = arith.index_cast %180 : i32 to index
    %c1_189 = arith.constant 1 : index
    %c0_190 = arith.constant 0 : index
    %182 = vector.load %arg2[%c0_187, %c1_188, %181, %c1_189, %c0_190] : memref<1x4x9x9x4xbf16, #tpu.memory_space<vmem>>, vector<1x1x8x8x4xbf16>
    %183 = vector.shape_cast %182 : vector<1x1x8x8x4xbf16> to vector<8x8x4xbf16>
    %c1_i32_191 = arith.constant 1 : i32
    %184 = arith.addi %0, %c1_i32_191 : i32
    %c0_192 = arith.constant 0 : index
    %c2_193 = arith.constant 2 : index
    %185 = arith.index_cast %184 : i32 to index
    %c1_194 = arith.constant 1 : index
    %c0_195 = arith.constant 0 : index
    %186 = vector.load %arg2[%c0_192, %c2_193, %185, %c1_194, %c0_195] : memref<1x4x9x9x4xbf16, #tpu.memory_space<vmem>>, vector<1x1x8x8x4xbf16>
    %187 = vector.shape_cast %186 : vector<1x1x8x8x4xbf16> to vector<8x8x4xbf16>
    %c1_i32_196 = arith.constant 1 : i32
    %188 = arith.addi %0, %c1_i32_196 : i32
    %c0_197 = arith.constant 0 : index
    %c3_198 = arith.constant 3 : index
    %189 = arith.index_cast %188 : i32 to index
    %c1_199 = arith.constant 1 : index
    %c0_200 = arith.constant 0 : index
    %190 = vector.load %arg2[%c0_197, %c3_198, %189, %c1_199, %c0_200] : memref<1x4x9x9x4xbf16, #tpu.memory_space<vmem>>, vector<1x1x8x8x4xbf16>
    %191 = vector.shape_cast %190 : vector<1x1x8x8x4xbf16> to vector<8x8x4xbf16>
    %192 = tpu.concatenate %179, %183, %187, %191 in 0 : vector<8x8x4xbf16>, vector<8x8x4xbf16>, vector<8x8x4xbf16>, vector<8x8x4xbf16> -> vector<32x8x4xbf16>
    %193 = vector.shape_cast %192 : vector<32x8x4xbf16> to vector<256x4xbf16>
    %c8 = arith.constant 8 : index
    %c0_201 = arith.constant 0 : index
    %c0_202 = arith.constant 0 : index
    %194 = vector.load %arg3[%c8, %c0_201, %c0_202] : memref<9x4x128xbf16, #tpu.memory_space<vmem>>, vector<1x4x128xbf16>
    %195 = vector.shape_cast %194 : vector<1x4x128xbf16> to vector<4x128xbf16>
    %cst_203 = arith.constant dense<0.000000e+00> : vector<256x128xf32>
    %196 = tpu.matmul %193, %195, %cst_203 {dimension_numbers = #tpu.dot_dimension_numbers<[1], [0], [0], [1], [0, 0, 1, 1], [], []>} : vector<256x4xbf16>, vector<4x128xbf16>, vector<256x128xf32> -> vector<256x128xf32>
    %197 = arith.addf %175, %196 : vector<256x128xf32>
    %198 = vector.extract_strided_slice %197 {offsets = [0, 0], sizes = [64, 128], strides = [1, 1]} : vector<256x128xf32> to vector<64x128xf32>
    %199 = vector.extract_strided_slice %197 {offsets = [64, 0], sizes = [64, 128], strides = [1, 1]} : vector<256x128xf32> to vector<64x128xf32>
    %200 = arith.maximumf %198, %199 : vector<64x128xf32>
    %201 = vector.extract_strided_slice %197 {offsets = [128, 0], sizes = [64, 128], strides = [1, 1]} : vector<256x128xf32> to vector<64x128xf32>
    %202 = vector.extract_strided_slice %197 {offsets = [192, 0], sizes = [64, 128], strides = [1, 1]} : vector<256x128xf32> to vector<64x128xf32>
    %203 = arith.maximumf %201, %202 : vector<64x128xf32>
    %204 = arith.maximumf %200, %203 : vector<64x128xf32>
    %c0_204 = arith.constant 0 : index
    %c0_205 = arith.constant 0 : index
    %205 = vector.load %arg4[%c0_204, %c0_205] : memref<1x128xf32, #tpu.memory_space<vmem>>, vector<1x128xf32>
    %206 = vector.broadcast %205 : vector<1x128xf32> to vector<64x128xf32>
    %207 = arith.addf %204, %206 : vector<64x128xf32>
    %cst_206 = arith.constant 0.000000e+00 : f32
    %208 = vector.broadcast %cst_206 : f32 to vector<64x128xf32>
    %209 = arith.maximumf %207, %208 : vector<64x128xf32>
    %c0_207 = arith.constant 0 : index
    %c0_208 = arith.constant 0 : index
    %c0_209 = arith.constant 0 : index
    %210 = vector.load %arg5[%c0_207, %c0_208, %c0_209] : memref<1x64x128xf32, #tpu.memory_space<vmem>>, vector<1x64x128xf32>
    %211 = vector.shape_cast %210 : vector<1x64x128xf32> to vector<64x128xf32>
    %212 = vector.shape_cast %209 : vector<64x128xf32> to vector<1x64x128xf32>
    tpu.vector_store %arg5[%c0_207, %c0_208, %c0_209], %212 {strides = array<i32>} : memref<1x64x128xf32, #tpu.memory_space<vmem>>, vector<1x64x128xf32>,
    return
  }
  func.func @transform_0(%arg0: i32, %arg1: i32) -> (i32, i32, i32, i32, i32) {
    %c0_i32 = arith.constant 0 : i32
    %c0_i32_0 = arith.constant 0 : i32
    %c0_i32_1 = arith.constant 0 : i32
    %c0_i32_2 = arith.constant 0 : i32
    %c0_i32_3 = arith.constant 0 : i32
    return %arg0, %c0_i32, %c0_i32_0, %c0_i32_1, %c0_i32_2 : i32, i32, i32, i32, i32
  }
  func.func @transform_1(%arg0: i32, %arg1: i32) -> (i32, i32, i32) {
    %c0_i32 = arith.constant 0 : i32
    %c0_i32_0 = arith.constant 0 : i32
    %c0_i32_1 = arith.constant 0 : i32
    %c0_i32_2 = arith.constant 0 : i32
    return %c0_i32, %c0_i32_0, %c0_i32_1 : i32, i32, i32
  }
  func.func @transform_2(%arg0: i32, %arg1: i32) -> (i32, i32) {
    %c0_i32 = arith.constant 0 : i32
    %c0_i32_0 = arith.constant 0 : i32
    %c0_i32_1 = arith.constant 0 : i32
    return %c0_i32, %c0_i32_0 : i32, i32
  }
  func.func @transform_3(%arg0: i32, %arg1: i32) -> (i32, i32, i32) {
    %c0_i32 = arith.constant 0 : i32
    %c0_i32_0 = arith.constant 0 : i32
    return %arg0, %arg1, %c0_i32 : i32, i32, i32
  }
}

</mosaic_0001>

<llo_original>
// kernel: tpu_custom_call.1
$region0: #{tpu_custom_call.1}
  #allocation0 [shape = 'u32[]', space=smem, size = 0x4, offset = 0x4, fixed_abs, tag = 'smem constant byte address 0x4 - core index']
  #allocation1 [shape = 'u32[72,128]{1,0:T(1,128)}', space=vmem, size = 0x9000, scoped, tag = 'internal scratch']
  %s0 = inlined_call_operand.vmem [shape: bf16[2,4,9,9,4], index: 0, kind: input, shape index: {}]
  %s1 = inlined_call_operand.vmem [shape: bf16[9,4,128], index: 1, kind: input, shape index: {}]
  %s2 = inlined_call_operand.vmem [shape: f32[1,128], index: 2, kind: input, shape index: {}]
  %s3 = inlined_call_operand.hbm [shape: f32[2,64,128], index: 3, kind: output, shape index: {}]
  %s4 = sld [smem:[#allocation0]]
  $region45: #{tpu_custom_call.1} parent=0
    _
  %s6 = ssub.s32 1, %s4
  %s7 = scalar_select 0, %s6, %s4
  $region1: #{tpu_custom_call.1} parent=0
    #allocation2 [shape = 'u8[65536]{0}', space=vmem, size = 0x10000, scoped, tag = 'output window, operand 0']
    #allocation3 [shape = 's32[2]{0}', space=sflag, size = 0x8, scoped, tag = 'scoped memory for tpu_custom_call.1']
    %8 = vsyncpa [#allocation3], 0
    %s9 = scalar_lea.sflag [#allocation3], 1
    %10 = vsyncpa %s9, 0
    loop: start=0, step=1, limit=4
    $region2: #{tpu_custom_call.1} parent=1 // loop_pre_header
      _
    $region3: #{tpu_custom_call.1} parent=1 // loop_header
      %s12 = sphi 0, %s16
      %p13 = scmp.ge.s32.totalorder %s12, 4
      %s19 = sphi 0, %s31
      %s20 = sphi 0, %s27
      %s21 = sphi 0, %s19
      %s22 = sphi 0, %s20
      %s23 = sphi 0, %s21
      %s24 = sphi 0, %s22
      %s34 = sphi 0, %s36
      %s37 = sphi 0, %s34
      %s38 = sphi 0, %s37
      %s54 = sphi 0, %s38
      %s58 = sphi 0, %s58
      %s60 = sphi 0, %s58
      %s61 = sphi 0, %s60
      %s75 = sphi 0, %s61
      %s79 = sphi 0, %s79
      %s81 = sphi 0, %s79
      %s82 = sphi 0, %s81
      %s96 = sphi 0, %s82
      %s104 = sphi 0, %s106
      %s107 = sphi 0, %s104
      %s108 = sphi 0, %s107
      %s124 = sphi 0, %s108
    $region4: #{tpu_custom_call.1} parent=1 // loop_header_branch
      %15 = sbr.rel (%p13) target = $region8
    $region5: #{tpu_custom_call.1} parent=1 // loop_body
      %s17 = ssub.s32 %s12, 1
      %s18 = ssub.s32 %s12, 2
      %s25 = sadd.s32 1, %s20
      %p26 = scmp.ge.s32.totalorder %s25, 1
      %s27 = scalar_select %p26, 0, %s25
      %s28 = sadd.s32 1, %s19
      %s29 = scalar_select %p26, %s28, %s19
      %p30 = scmp.ge.s32.totalorder %s29, 2
      %s31 = scalar_select %p30, 0, %s29
      %s32 = ssub.s32 %s19, %s31
      %p33 = scmp.eq.s32.totalorder %s32, 0
      %s35 = sadd.s32 %s34, 1
      %s36 = scalar_select %p33, %s34, %s35
      %p39 = pneg %p33
      %p40 = scmp.eq.s32.totalorder %s12, 1
      %p41 = por %p39, %p40
      %p42 = scmp.ne.s32.totalorder %s34, %s37
      %p43 = scmp.eq.s32.totalorder %s12, 0
      %p44 = por %p42, %p43
      %p45 = scmp.ne.s32.totalorder %s34, %s37
      %p46 = scmp.eq.s32.totalorder %s17, 1
      %p47 = por %p45, %p46
      %p48 = scmp.ne.s32.totalorder %s37, %s38
      %p49 = scmp.eq.s32.totalorder %s17, 0
      %p50 = por %p48, %p49
      %p51 = scmp.ne.s32.totalorder %s37, %s38
      %p52 = scmp.eq.s32.totalorder %s18, 1
      %p53 = por %p51, %p52
      %p55 = scmp.ne.s32.totalorder %s38, %s54
      %p56 = scmp.eq.s32.totalorder %s18, 0
      %p57 = por %p55, %p56
      %s59 = sadd.s32 %s58, 1
      %p62 = scmp.eq.s32.totalorder %s12, 1
      %p63 = scmp.ne.s32.totalorder %s58, %s60
      %p64 = scmp.eq.s32.totalorder %s12, 0
      %p65 = por %p63, %p64
      %p66 = scmp.ne.s32.totalorder %s58, %s60
      %p67 = scmp.eq.s32.totalorder %s17, 1
      %p68 = por %p66, %p67
      %p69 = scmp.ne.s32.totalorder %s60, %s61
      %p70 = scmp.eq.s32.totalorder %s17, 0
      %p71 = por %p69, %p70
      %p72 = scmp.ne.s32.totalorder %s60, %s61
      %p73 = scmp.eq.s32.totalorder %s18, 1
      %p74 = por %p72, %p73
      %p76 = scmp.ne.s32.totalorder %s61, %s75
      %p77 = scmp.eq.s32.totalorder %s18, 0
      %p78 = por %p76, %p77
      %s80 = sadd.s32 %s79, 1
      %p83 = scmp.eq.s32.totalorder %s12, 1
      %p84 = scmp.ne.s32.totalorder %s79, %s81
      %p85 = scmp.eq.s32.totalorder %s12, 0
      %p86 = por %p84, %p85
      %p87 = scmp.ne.s32.totalorder %s79, %s81
      %p88 = scmp.eq.s32.totalorder %s17, 1
      %p89 = por %p87, %p88
      %p90 = scmp.ne.s32.totalorder %s81, %s82
      %p91 = scmp.eq.s32.totalorder %s17, 0
      %p92 = por %p90, %p91
      %p93 = scmp.ne.s32.totalorder %s81, %s82
      %p94 = scmp.eq.s32.totalorder %s18, 1
      %p95 = por %p93, %p94
      %p97 = scmp.ne.s32.totalorder %s82, %s96
      %p98 = scmp.eq.s32.totalorder %s18, 0
      %p99 = por %p97, %p98
      %s100 = ssub.s32 %s19, %s31
      %s101 = ssub.s32 %s20, %s27
      %s102 = sor.u32 %s100, %s101
      %p103 = scmp.eq.s32.totalorder %s102, 0
      %s105 = sadd.s32 %s104, 1
      %s106 = scalar_select %p103, %s104, %s105
      %p109 = pneg %p103
      %p110 = scmp.eq.s32.totalorder %s12, 1
      %p111 = por %p109, %p110
      %p112 = scmp.ne.s32.totalorder %s104, %s107
      %p113 = scmp.eq.s32.totalorder %s12, 0
      %p114 = por %p112, %p113
      %p115 = scmp.ne.s32.totalorder %s104, %s107
      %p116 = scmp.eq.s32.totalorder %s17, 1
      %p117 = por %p115, %p116
      %p118 = scmp.ne.s32.totalorder %s107, %s108
      %p119 = scmp.eq.s32.totalorder %s17, 0
      %p120 = por %p118, %p119
      %p121 = scmp.ne.s32.totalorder %s107, %s108
      %p122 = scmp.eq.s32.totalorder %s18, 1
      %p123 = por %p121, %p122
      %p125 = scmp.ne.s32.totalorder %s108, %s124
      %p126 = scmp.eq.s32.totalorder %s18, 0
      %p127 = por %p125, %p126
      %p128 = scmp.le.s32.totalorder 1, %s12
      %p129 = scmp.lt.s32.totalorder %s12, 3
      %p130 = pnand %p128, %p129
      %p131 = pneg %p130
      // Predicated region
      $region9: #{tpu_custom_call.1} parent=5 // pred_check
        _
      $region10: #{tpu_custom_call.1} parent=5 // pred_check_branch
        %133 = sbr.rel (%p130) target = $region12
      $region11: #{tpu_custom_call.1} parent=5 // pred_region
        %s134 = ssub.s32 %s12, 1
        // Predicated region
        $region13: #{tpu_custom_call.1} parent=11 // pred_check
          %p135 = pneg %p71
        $region14: #{tpu_custom_call.1} parent=11 // pred_check_branch
          %137 = sbr.rel (%p135) target = $region16
        $region15: #{tpu_custom_call.1} parent=11 // pred_region
          _
        $region16: #{tpu_custom_call.1} parent=11 // pred_fallthru
          _
        // Predicated region
        $region17: #{tpu_custom_call.1} parent=11 // pred_check
          %p138 = pneg %p92
        $region18: #{tpu_custom_call.1} parent=11 // pred_check_branch
          %140 = sbr.rel (%p138) target = $region20
        $region19: #{tpu_custom_call.1} parent=11 // pred_region
          _
        $region20: #{tpu_custom_call.1} parent=11 // pred_fallthru
          _
      $region12: #{tpu_custom_call.1} parent=5 // pred_fallthru
        _
      %p141 = scmp.lt.s32.totalorder %s12, 2
      // Predicated region
      $region21: #{tpu_custom_call.1} parent=5 // pred_check
        %p142 = pneg %p141
      $region22: #{tpu_custom_call.1} parent=5 // pred_check_branch
        %144 = sbr.rel (%p142) target = $region24
      $region23: #{tpu_custom_call.1} parent=5 // pred_region
        // Predicated region
        $region25: #{tpu_custom_call.1} parent=23 // pred_check
          %p145 = pneg %p44
        $region26: #{tpu_custom_call.1} parent=23 // pred_check_branch
          %147 = sbr.rel (%p145) target = $region28
        $region27: #{tpu_custom_call.1} parent=23 // pred_region
          %p148 = scmp.lt.s32.totalorder %s19, 1
          %s149 = scalar_select %p148, %s19, 1
          %s150 = smul.addr %s149, 72
          %s151 = smul.addr %s150, 4
          %s152 = scalar_lea.vmem %s0, %s151
        $region28: #{tpu_custom_call.1} parent=23 // pred_fallthru
          _
      $region24: #{tpu_custom_call.1} parent=5 // pred_fallthru
        _
      %p153 = scmp.le.s32.totalorder 1, %s12
      %p154 = scmp.lt.s32.totalorder %s12, 3
      %p155 = pnand %p153, %p154
      %p156 = pneg %p155
      // Predicated region
      $region29: #{tpu_custom_call.1} parent=5 // pred_check
        _
      $region30: #{tpu_custom_call.1} parent=5 // pred_check_branch
        %158 = sbr.rel (%p155) target = $region32
      $region31: #{tpu_custom_call.1} parent=5 // pred_region
        %s159 = ssub.s32 %s12, 1
        %p160 = scmp.lt.s32.totalorder %s21, 1
        %s161 = scalar_select %p160, %s21, 1
        %s162 = smul.addr %s161, 72
        %s163 = smul.addr %s162, 4
        %s164 = scalar_lea.vmem %s0, %s163
        %p165 = pneg %p50
        %p166 = pneg %p47
        %p167 = pneg %p71
        %p168 = pneg %p68
        %p169 = pneg %p92
        %p170 = pneg %p89
        %p171 = pneg %p120
        %p172 = pneg %p117
        %s173 = sand.u32 %s107, 1
        %s174 = scalar_lea.sflag [#allocation3], %s173
        %s175 = sand.u32 %s107, 1
        %s176 = smul.addr %s175, 64
        %s177 = scalar_lea.vmem [#allocation2], %s176
        %p178 = scmp.lt.s32.totalorder %s21, 1
        %s179 = scalar_select %p178, %s21, 1
        %s180 = smul.addr %s179, 72
        %s181 = smul.addr %s180, 4
        %s182 = scalar_lea.vmem %s0, %s181
        %s183 = smul.u32 8, %s22
        %s185 = smul.u32 %s22, 8
        %s186 = smul.u32 %s185, 2
        %s187 = smul.addr %s186, 4
        %s188 = scalar_lea.vmem %s182, %s187
        %v189 = vld [vmem:[%s188] sm:$0xf]
        %v190 = vld [vmem:[%s188 + $0x8] sm:$0xf]
        %v191 = vld [vmem:[%s188 + $0x10] sm:$0xf]
        %v192 = vld [vmem:[%s188 + $0x18] sm:$0xf]
        %v193 = vld [vmem:[%s188 + $0x20] sm:$0xf]
        %v194 = vld [vmem:[%s188 + $0x28] sm:$0xf]
        %v195 = vld [vmem:[%s188 + $0x30] sm:$0xf]
        %v196 = vld [vmem:[%s188 + $0x38] sm:$0xf]
        %s197 = sadd.s32 %s186, 18
        %s198 = smul.addr %s197, 4
        %s199 = scalar_lea.vmem %s182, %s198
        %v200 = vld [vmem:[%s199] sm:$0xf]
        %v201 = vld [vmem:[%s199 + $0x8] sm:$0xf]
        %v202 = vld [vmem:[%s199 + $0x10] sm:$0xf]
        %v203 = vld [vmem:[%s199 + $0x18] sm:$0xf]
        %v204 = vld [vmem:[%s199 + $0x20] sm:$0xf]
        %v205 = vld [vmem:[%s199 + $0x28] sm:$0xf]
        %v206 = vld [vmem:[%s199 + $0x30] sm:$0xf]
        %v207 = vld [vmem:[%s199 + $0x38] sm:$0xf]
        %s208 = sadd.s32 %s186, 36
        %s209 = smul.addr %s208, 4
        %s210 = scalar_lea.vmem %s182, %s209
        %v211 = vld [vmem:[%s210] sm:$0xf]
        %v212 = vld [vmem:[%s210 + $0x8] sm:$0xf]
        %v213 = vld [vmem:[%s210 + $0x10] sm:$0xf]
        %v214 = vld [vmem:[%s210 + $0x18] sm:$0xf]
        %v215 = vld [vmem:[%s210 + $0x20] sm:$0xf]
        %v216 = vld [vmem:[%s210 + $0x28] sm:$0xf]
        %v217 = vld [vmem:[%s210 + $0x30] sm:$0xf]
        %v218 = vld [vmem:[%s210 + $0x38] sm:$0xf]
        %s219 = sadd.s32 %s186, 54
        %s220 = smul.addr %s219, 4
        %s221 = scalar_lea.vmem %s182, %s220
        %v222 = vld [vmem:[%s221] sm:$0xf]
        %v223 = vld [vmem:[%s221 + $0x8] sm:$0xf]
        %v224 = vld [vmem:[%s221 + $0x10] sm:$0xf]
        %v225 = vld [vmem:[%s221 + $0x18] sm:$0xf]
        %v226 = vld [vmem:[%s221 + $0x20] sm:$0xf]
        %v227 = vld [vmem:[%s221 + $0x28] sm:$0xf]
        %v228 = vld [vmem:[%s221 + $0x30] sm:$0xf]
        %v229 = vld [vmem:[%s221 + $0x38] sm:$0xf]
        %v230 = vld [vmem:[%s1] sm:$0x3]
        %v231 = vld [vmem:[%s188 + $0x4] sm:$0x1]
        %v232 = vld [vmem:[%s188 + $0xc] sm:$0x1]
        %v233 = vld [vmem:[%s188 + $0x14] sm:$0x1]
        %v234 = vld [vmem:[%s188 + $0x1c] sm:$0x1]
        %v235 = vld [vmem:[%s188 + $0x24] sm:$0x1]
        %v236 = vld [vmem:[%s188 + $0x2c] sm:$0x1]
        %v237 = vld [vmem:[%s188 + $0x34] sm:$0x1]
        %v238 = vld [vmem:[%s188 + $0x3c] sm:$0x1]
        %v239 = vld [vmem:[%s210 + $0x4] sm:$0x1]
        %v240 = vld [vmem:[%s210 + $0xc] sm:$0x1]
        %v241 = vld [vmem:[%s210 + $0x14] sm:$0x1]
        %v242 = vld [vmem:[%s210 + $0x1c] sm:$0x1]
        %v243 = vld [vmem:[%s210 + $0x24] sm:$0x1]
        %v244 = vld [vmem:[%s210 + $0x2c] sm:$0x1]
        %v245 = vld [vmem:[%s210 + $0x34] sm:$0x1]
        %v246 = vld [vmem:[%s210 + $0x3c] sm:$0x1]
        %vm247 = vsmask.f32 3328
        %vm248 = vsmask.f32 7440
        %vm249 = vmor %vm247, %vm248
        %v251 = vshrl.u32 %v189, 16
        %v253 = vrot.slane %v251, 4
        %v254 = vshll.u32 %v189, 16
        %v256 = vrot.slane %v254, 5
        %v257 = vor.u32 %v253, %v256
        %v258 = vrot.slane %v257, 4
        %v260 = vshll.u32 %v231, 16
        %v262 = vrot.slane %v260, 5
        %v263 = vsel %vm249, %v258, %v262
        %v265 = vshrl.u32 %v190, 16
        %v267 = vrot.slane %v265, 4
        %v268 = vshll.u32 %v190, 16
        %v270 = vrot.slane %v268, 5
        %v271 = vor.u32 %v267, %v270
        %v272 = vrot.slane %v271, 4
        %v274 = vshll.u32 %v232, 16
        %v276 = vrot.slane %v274, 5
        %v277 = vsel %vm249, %v272, %v276
        %v279 = vshrl.u32 %v191, 16
        %v281 = vrot.slane %v279, 4
        %v282 = vshll.u32 %v191, 16
        %v284 = vrot.slane %v282, 5
        %v285 = vor.u32 %v281, %v284
        %v286 = vrot.slane %v285, 4
        %v288 = vshll.u32 %v233, 16
        %v290 = vrot.slane %v288, 5
        %v291 = vsel %vm249, %v286, %v290
        %v293 = vshrl.u32 %v192, 16
        %v295 = vrot.slane %v293, 4
        %v296 = vshll.u32 %v192, 16
        %v298 = vrot.slane %v296, 5
        %v299 = vor.u32 %v295, %v298
        %v300 = vrot.slane %v299, 4
        %v302 = vshll.u32 %v234, 16
        %v304 = vrot.slane %v302, 5
        %v305 = vsel %vm249, %v300, %v304
        %v307 = vshrl.u32 %v193, 16
        %v309 = vrot.slane %v307, 4
        %v310 = vshll.u32 %v193, 16
        %v312 = vrot.slane %v310, 5
        %v313 = vor.u32 %v309, %v312
        %v314 = vrot.slane %v313, 4
        %v316 = vshll.u32 %v235, 16
        %v318 = vrot.slane %v316, 5
        %v319 = vsel %vm249, %v314, %v318
        %v321 = vshrl.u32 %v194, 16
        %v323 = vrot.slane %v321, 4
        %v324 = vshll.u32 %v194, 16
        %v326 = vrot.slane %v324, 5
        %v327 = vor.u32 %v323, %v326
        %v328 = vrot.slane %v327, 4
        %v330 = vshll.u32 %v236, 16
        %v332 = vrot.slane %v330, 5
        %v333 = vsel %vm249, %v328, %v332
        %v335 = vshrl.u32 %v195, 16
        %v337 = vrot.slane %v335, 4
        %v338 = vshll.u32 %v195, 16
        %v340 = vrot.slane %v338, 5
        %v341 = vor.u32 %v337, %v340
        %v342 = vrot.slane %v341, 4
        %v344 = vshll.u32 %v237, 16
        %v346 = vrot.slane %v344, 5
        %v347 = vsel %vm249, %v342, %v346
        %v349 = vshrl.u32 %v196, 16
        %v351 = vrot.slane %v349, 4
        %v352 = vshll.u32 %v196, 16
        %v354 = vrot.slane %v352, 5
        %v355 = vor.u32 %v351, %v354
        %v356 = vrot.slane %v355, 4
        %v358 = vshll.u32 %v238, 16
        %v360 = vrot.slane %v358, 5
        %v361 = vsel %vm249, %v356, %v360
        %v363 = vshrl.u32 %v211, 16
        %v365 = vrot.slane %v363, 4
        %v366 = vshll.u32 %v211, 16
        %v368 = vrot.slane %v366, 5
        %v369 = vor.u32 %v365, %v368
        %v370 = vrot.slane %v369, 4
        %v372 = vshll.u32 %v239, 16
        %v374 = vrot.slane %v372, 5
        %v375 = vsel %vm249, %v370, %v374
        %v377 = vshrl.u32 %v212, 16
        %v379 = vrot.slane %v377, 4
        %v380 = vshll.u32 %v212, 16
        %v382 = vrot.slane %v380, 5
        %v383 = vor.u32 %v379, %v382
        %v384 = vrot.slane %v383, 4
        %v386 = vshll.u32 %v240, 16
        %v388 = vrot.slane %v386, 5
        %v389 = vsel %vm249, %v384, %v388
        %v391 = vshrl.u32 %v213, 16
        %v393 = vrot.slane %v391, 4
        %v394 = vshll.u32 %v213, 16
        %v396 = vrot.slane %v394, 5
        %v397 = vor.u32 %v393, %v396
        %v398 = vrot.slane %v397, 4
        %v400 = vshll.u32 %v241, 16
        %v402 = vrot.slane %v400, 5
        %v403 = vsel %vm249, %v398, %v402
        %v405 = vshrl.u32 %v214, 16
        %v407 = vrot.slane %v405, 4
        %v408 = vshll.u32 %v214, 16
        %v410 = vrot.slane %v408, 5
        %v411 = vor.u32 %v407, %v410
        %v412 = vrot.slane %v411, 4
        %v414 = vshll.u32 %v242, 16
        %v416 = vrot.slane %v414, 5
        %v417 = vsel %vm249, %v412, %v416
        %v419 = vshrl.u32 %v215, 16
        %v421 = vrot.slane %v419, 4
        %v422 = vshll.u32 %v215, 16
        %v424 = vrot.slane %v422, 5
        %v425 = vor.u32 %v421, %v424
        %v426 = vrot.slane %v425, 4
        %v428 = vshll.u32 %v243, 16
        %v430 = vrot.slane %v428, 5
        %v431 = vsel %vm249, %v426, %v430
        %v433 = vshrl.u32 %v216, 16
        %v435 = vrot.slane %v433, 4
        %v436 = vshll.u32 %v216, 16
        %v438 = vrot.slane %v436, 5
        %v439 = vor.u32 %v435, %v438
        %v440 = vrot.slane %v439, 4
        %v442 = vshll.u32 %v244, 16
        %v444 = vrot.slane %v442, 5
        %v445 = vsel %vm249, %v440, %v444
        %v447 = vshrl.u32 %v217, 16
        %v449 = vrot.slane %v447, 4
        %v450 = vshll.u32 %v217, 16
        %v452 = vrot.slane %v450, 5
        %v453 = vor.u32 %v449, %v452
        %v454 = vrot.slane %v453, 4
        %v456 = vshll.u32 %v245, 16
        %v458 = vrot.slane %v456, 5
        %v459 = vsel %vm249, %v454, %v458
        %v461 = vshrl.u32 %v218, 16
        %v463 = vrot.slane %v461, 4
        %v464 = vshll.u32 %v218, 16
        %v466 = vrot.slane %v464, 5
        %v467 = vor.u32 %v463, %v466
        %v468 = vrot.slane %v467, 4
        %v470 = vshll.u32 %v246, 16
        %v472 = vrot.slane %v470, 5
        %v473 = vsel %vm249, %v468, %v472
        %s474 = scalar_lea.vmem %s1, 2
        %v475 = vld [vmem:[%s474] sm:$0x3]
        %v492 = vunpack.c.l.b16 %v200
        %v493 = vunpack.c.l.b16 %v201
        %v494 = vunpack.c.l.b16 %v202
        %v495 = vunpack.c.l.b16 %v203
        %v496 = vunpack.c.l.b16 %v204
        %v497 = vunpack.c.l.b16 %v205
        %v498 = vunpack.c.l.b16 %v206
        %v499 = vunpack.c.l.b16 %v207
        %v500 = vunpack.c.l.b16 %v263
        %v501 = vunpack.c.l.b16 %v277
        %v502 = vunpack.c.l.b16 %v291
        %v503 = vunpack.c.l.b16 %v305
        %v504 = vunpack.c.l.b16 %v319
        %v505 = vunpack.c.l.b16 %v333
        %v506 = vunpack.c.l.b16 %v347
        %v507 = vunpack.c.l.b16 %v361
        %v508 = vunpack.c.l.b16 %v222
        %v509 = vunpack.c.l.b16 %v223
        %v510 = vunpack.c.l.b16 %v224
        %v511 = vunpack.c.l.b16 %v225
        %v512 = vunpack.c.l.b16 %v226
        %v513 = vunpack.c.l.b16 %v227
        %v514 = vunpack.c.l.b16 %v228
        %v515 = vunpack.c.l.b16 %v229
        %v516 = vunpack.c.l.b16 %v375
        %v517 = vunpack.c.l.b16 %v389
        %v518 = vunpack.c.l.b16 %v403
        %v519 = vunpack.c.l.b16 %v417
        %v520 = vunpack.c.l.b16 %v431
        %v521 = vunpack.c.l.b16 %v445
        %v522 = vunpack.c.l.b16 %v459
        %v523 = vunpack.c.l.b16 %v473
        %v524 = vpack.c.b16 %v493, %v492
        %v525 = vpack.c.b16 %v495, %v494
        %v526 = vpack.c.b16 %v497, %v496
        %v527 = vpack.c.b16 %v499, %v498
        %v528 = vpack.c.b16 %v501, %v500
        %v529 = vpack.c.b16 %v503, %v502
        %v530 = vpack.c.b16 %v505, %v504
        %v531 = vpack.c.b16 %v507, %v506
        %v532 = vpack.c.b16 %v509, %v508
        %v533 = vpack.c.b16 %v511, %v510
        %v534 = vpack.c.b16 %v513, %v512
        %v535 = vpack.c.b16 %v515, %v514
        %v536 = vpack.c.b16 %v517, %v516
        %v537 = vpack.c.b16 %v519, %v518
        %v538 = vpack.c.b16 %v521, %v520
        %v539 = vpack.c.b16 %v523, %v522
        %vm540 = vcmask 31744
        %v542 = vsel %vm540, %v524, 0
        %v545 = vsel %vm540, %v525, 0
        %v548 = vsel %vm540, %v526, 0
        %v551 = vsel %vm540, %v527, 0
        %v554 = vsel %vm540, %v528, 0
        %v557 = vsel %vm540, %v529, 0
        %v560 = vsel %vm540, %v530, 0
        %v563 = vsel %vm540, %v531, 0
        %v566 = vsel %vm540, %v532, 0
        %v569 = vsel %vm540, %v533, 0
        %v572 = vsel %vm540, %v534, 0
        %v575 = vsel %vm540, %v535, 0
        %v578 = vsel %vm540, %v536, 0
        %v581 = vsel %vm540, %v537, 0
        %v584 = vsel %vm540, %v538, 0
        %v587 = vsel %vm540, %v539, 0
        %vm589 = vcmask 1041408
        %v591 = vsel %vm589, %v475, 0
        %593 = vmatpush.bf16.msra.mxu0 0
        %594 = vmatpush.bf16.msra.mxu0 0
        %595 = vmatpush.bf16.msra.mxu0 0
        %596 = vmatpush.bf16.msra.mxu0 0
        %597 = vmatpush.bf16.msra.mxu0 0
        %598 = vmatpush.bf16.msra.mxu0 0
        %599 = vmatpush.bf16.msra.mxu0 0
        %600 = vmatpush.bf16.msra.mxu0 %v591
        %601 = vmatmul.bf16.gmra.mxu0 %v542
        %v602 = vpop.f32.mrf.mxu0
        %v603 = vadd.f32 0.0, %v602
        %v604 = vpop.f32.mrf.mxu0
        %v605 = vadd.f32 0.0, %v604
        %606 = vmatmul.bf16.gmra.mxu0 %v545
        %v607 = vpop.f32.mrf.mxu0
        %v608 = vadd.f32 0.0, %v607
        %v609 = vpop.f32.mrf.mxu0
        %v610 = vadd.f32 0.0, %v609
        %611 = vmatmul.bf16.gmra.mxu0 %v548
        %v612 = vpop.f32.mrf.mxu0
        %v613 = vadd.f32 0.0, %v612
        %v614 = vpop.f32.mrf.mxu0
        %v615 = vadd.f32 0.0, %v614
        %616 = vmatmul.bf16.gmra.mxu0 %v551
        %v617 = vpop.f32.mrf.mxu0
        %v618 = vadd.f32 0.0, %v617
        %v619 = vpop.f32.mrf.mxu0
        %v620 = vadd.f32 0.0, %v619
        %621 = vmatmul.bf16.gmra.mxu0 %v554
        %v622 = vpop.f32.mrf.mxu0
        %v623 = vadd.f32 0.0, %v622
        %v624 = vpop.f32.mrf.mxu0
        %v625 = vadd.f32 0.0, %v624
        %626 = vmatmul.bf16.gmra.mxu0 %v557
        %v627 = vpop.f32.mrf.mxu0
        %v628 = vadd.f32 0.0, %v627
        %v629 = vpop.f32.mrf.mxu0
        %v630 = vadd.f32 0.0, %v629
        %631 = vmatmul.bf16.gmra.mxu0 %v560
        %v632 = vpop.f32.mrf.mxu0
        %v633 = vadd.f32 0.0, %v632
        %v634 = vpop.f32.mrf.mxu0
        %v635 = vadd.f32 0.0, %v634
        %636 = vmatmul.bf16.gmra.mxu0 %v563
        %v637 = vpop.f32.mrf.mxu0
        %v638 = vadd.f32 0.0, %v637
        %v639 = vpop.f32.mrf.mxu0
        %v640 = vadd.f32 0.0, %v639
        %641 = vmatmul.bf16.gmra.mxu0 %v566
        %v642 = vpop.f32.mrf.mxu0
        %v643 = vadd.f32 0.0, %v642
        %v644 = vpop.f32.mrf.mxu0
        %v645 = vadd.f32 0.0, %v644
        %646 = vmatmul.bf16.gmra.mxu0 %v569
        %v647 = vpop.f32.mrf.mxu0
        %v648 = vadd.f32 0.0, %v647
        %v649 = vpop.f32.mrf.mxu0
        %v650 = vadd.f32 0.0, %v649
        %651 = vmatmul.bf16.gmra.mxu0 %v572
        %v652 = vpop.f32.mrf.mxu0
        %v653 = vadd.f32 0.0, %v652
        %v654 = vpop.f32.mrf.mxu0
        %v655 = vadd.f32 0.0, %v654
        %656 = vmatmul.bf16.gmra.mxu0 %v575
        %v657 = vpop.f32.mrf.mxu0
        %v658 = vadd.f32 0.0, %v657
        %v659 = vpop.f32.mrf.mxu0
        %v660 = vadd.f32 0.0, %v659
        %661 = vmatmul.bf16.gmra.mxu0 %v578
        %v662 = vpop.f32.mrf.mxu0
        %v663 = vadd.f32 0.0, %v662
        %v664 = vpop.f32.mrf.mxu0
        %v665 = vadd.f32 0.0, %v664
        %666 = vmatmul.bf16.gmra.mxu0 %v581
        %v667 = vpop.f32.mrf.mxu0
        %v668 = vadd.f32 0.0, %v667
        %v669 = vpop.f32.mrf.mxu0
        %v670 = vadd.f32 0.0, %v669
        %671 = vmatmul.bf16.gmra.mxu0 %v584
        %v672 = vpop.f32.mrf.mxu0
        %v673 = vadd.f32 0.0, %v672
        %v674 = vpop.f32.mrf.mxu0
        %v675 = vadd.f32 0.0, %v674
        %676 = vmatmul.bf16.gmra.mxu0 %v587
        %v677 = vpop.f32.mrf.mxu0
        %v678 = vadd.f32 0.0, %v677
        %v679 = vpop.f32.mrf.mxu0
        %v680 = vadd.f32 0.0, %v679
        %681 = vdwg.mxu0
        %v698 = vunpack.c.l.b16 %v189
        %v699 = vunpack.c.l.b16 %v190
        %v700 = vunpack.c.l.b16 %v191
        %v701 = vunpack.c.l.b16 %v192
        %v702 = vunpack.c.l.b16 %v193
        %v703 = vunpack.c.l.b16 %v194
        %v704 = vunpack.c.l.b16 %v195
        %v705 = vunpack.c.l.b16 %v196
        %v706 = vunpack.c.l.b16 %v211
        %v707 = vunpack.c.l.b16 %v212
        %v708 = vunpack.c.l.b16 %v213
        %v709 = vunpack.c.l.b16 %v214
        %v710 = vunpack.c.l.b16 %v215
        %v711 = vunpack.c.l.b16 %v216
        %v712 = vunpack.c.l.b16 %v217
        %v713 = vunpack.c.l.b16 %v218
        %v714 = vpack.c.b16 %v699, %v698
        %v715 = vpack.c.b16 %v701, %v700
        %v716 = vpack.c.b16 %v703, %v702
        %v717 = vpack.c.b16 %v705, %v704
        %v718 = vpack.c.b16 %v707, %v706
        %v719 = vpack.c.b16 %v709, %v708
        %v720 = vpack.c.b16 %v711, %v710
        %v721 = vpack.c.b16 %v713, %v712
        %v723 = vsel %vm540, %v714, 0
        %v726 = vsel %vm540, %v715, 0
        %v729 = vsel %vm540, %v716, 0
        %v732 = vsel %vm540, %v717, 0
        %v735 = vsel %vm540, %v718, 0
        %v738 = vsel %vm540, %v719, 0
        %v741 = vsel %vm540, %v720, 0
        %v744 = vsel %vm540, %v721, 0
        %v747 = vsel %vm589, %v230, 0
        %749 = vmatpush.bf16.msra.mxu0 0
        %750 = vmatpush.bf16.msra.mxu0 0
        %751 = vmatpush.bf16.msra.mxu0 0
        %752 = vmatpush.bf16.msra.mxu0 0
        %753 = vmatpush.bf16.msra.mxu0 0
        %754 = vmatpush.bf16.msra.mxu0 0
        %755 = vmatpush.bf16.msra.mxu0 0
        %756 = vmatpush.bf16.msra.mxu0 %v747
        %757 = vmatmul.bf16.gmra.mxu0 %v723
        %v758 = vpop.f32.mrf.mxu0
        %v759 = vadd.f32 %v603, %v758
        %v760 = vpop.f32.mrf.mxu0
        %v761 = vadd.f32 %v605, %v760
        %762 = vmatmul.bf16.gmra.mxu0 %v726
        %v763 = vpop.f32.mrf.mxu0
        %v764 = vadd.f32 %v608, %v763
        %v765 = vpop.f32.mrf.mxu0
        %v766 = vadd.f32 %v610, %v765
        %767 = vmatmul.bf16.gmra.mxu0 %v729
        %v768 = vpop.f32.mrf.mxu0
        %v769 = vadd.f32 %v613, %v768
        %v770 = vpop.f32.mrf.mxu0
        %v771 = vadd.f32 %v615, %v770
        %772 = vmatmul.bf16.gmra.mxu0 %v732
        %v773 = vpop.f32.mrf.mxu0
        %v774 = vadd.f32 %v618, %v773
        %v775 = vpop.f32.mrf.mxu0
        %v776 = vadd.f32 %v620, %v775
        %777 = vmatmul.bf16.gmra.mxu0 %v542
        %v778 = vpop.f32.mrf.mxu0
        %v779 = vadd.f32 %v623, %v778
        %v780 = vpop.f32.mrf.mxu0
        %v781 = vadd.f32 %v625, %v780
        %782 = vmatmul.bf16.gmra.mxu0 %v545
        %v783 = vpop.f32.mrf.mxu0
        %v784 = vadd.f32 %v628, %v783
        %v785 = vpop.f32.mrf.mxu0
        %v786 = vadd.f32 %v630, %v785
        %787 = vmatmul.bf16.gmra.mxu0 %v548
        %v788 = vpop.f32.mrf.mxu0
        %v789 = vadd.f32 %v633, %v788
        %v790 = vpop.f32.mrf.mxu0
        %v791 = vadd.f32 %v635, %v790
        %792 = vmatmul.bf16.gmra.mxu0 %v551
        %v793 = vpop.f32.mrf.mxu0
        %v794 = vadd.f32 %v638, %v793
        %v795 = vpop.f32.mrf.mxu0
        %v796 = vadd.f32 %v640, %v795
        %797 = vmatmul.bf16.gmra.mxu0 %v735
        %v798 = vpop.f32.mrf.mxu0
        %v799 = vadd.f32 %v643, %v798
        %v800 = vpop.f32.mrf.mxu0
        %v801 = vadd.f32 %v645, %v800
        %802 = vmatmul.bf16.gmra.mxu0 %v738
        %v803 = vpop.f32.mrf.mxu0
        %v804 = vadd.f32 %v648, %v803
        %v805 = vpop.f32.mrf.mxu0
        %v806 = vadd.f32 %v650, %v805
        %807 = vmatmul.bf16.gmra.mxu0 %v741
        %v808 = vpop.f32.mrf.mxu0
        %v809 = vadd.f32 %v653, %v808
        %v810 = vpop.f32.mrf.mxu0
        %v811 = vadd.f32 %v655, %v810
        %812 = vmatmul.bf16.gmra.mxu0 %v744
        %v813 = vpop.f32.mrf.mxu0
        %v814 = vadd.f32 %v658, %v813
        %v815 = vpop.f32.mrf.mxu0
        %v816 = vadd.f32 %v660, %v815
        %817 = vmatmul.bf16.gmra.mxu0 %v566
        %v818 = vpop.f32.mrf.mxu0
        %v819 = vadd.f32 %v663, %v818
        %v820 = vpop.f32.mrf.mxu0
        %v821 = vadd.f32 %v665, %v820
        %822 = vmatmul.bf16.gmra.mxu0 %v569
        %v823 = vpop.f32.mrf.mxu0
        %v824 = vadd.f32 %v668, %v823
        %v825 = vpop.f32.mrf.mxu0
        %v826 = vadd.f32 %v670, %v825
        %827 = vmatmul.bf16.gmra.mxu0 %v572
        %v828 = vpop.f32.mrf.mxu0
        %v829 = vadd.f32 %v673, %v828
        %v830 = vpop.f32.mrf.mxu0
        %v831 = vadd.f32 %v675, %v830
        %832 = vmatmul.bf16.gmra.mxu0 %v575
        %v833 = vpop.f32.mrf.mxu0
        %v834 = vadd.f32 %v678, %v833
        %v835 = vpop.f32.mrf.mxu0
        %v836 = vadd.f32 %v680, %v835
        %837 = vdwg.mxu0
        %v838 = vld [vmem:[%s199] sm:$0xf]
        %v839 = vld [vmem:[%s199 + $0x4] sm:$0x1]
        %v840 = vld [vmem:[%s199 + $0x8] sm:$0xf]
        %v841 = vld [vmem:[%s199 + $0xc] sm:$0x1]
        %v842 = vld [vmem:[%s199 + $0x10] sm:$0xf]
        %v843 = vld [vmem:[%s199 + $0x14] sm:$0x1]
        %v844 = vld [vmem:[%s199 + $0x18] sm:$0xf]
        %v845 = vld [vmem:[%s199 + $0x1c] sm:$0x1]
        %v846 = vld [vmem:[%s199 + $0x20] sm:$0xf]
        %v847 = vld [vmem:[%s199 + $0x24] sm:$0x1]
        %v848 = vld [vmem:[%s199 + $0x28] sm:$0xf]
        %v849 = vld [vmem:[%s199 + $0x2c] sm:$0x1]
        %v850 = vld [vmem:[%s199 + $0x30] sm:$0xf]
        %v851 = vld [vmem:[%s199 + $0x34] sm:$0x1]
        %v852 = vld [vmem:[%s199 + $0x38] sm:$0xf]
        %v853 = vld [vmem:[%s199 + $0x3c] sm:$0x1]
        %v854 = vld [vmem:[%s221] sm:$0xf]
        %v855 = vld [vmem:[%s221 + $0x4] sm:$0x1]
        %v856 = vld [vmem:[%s221 + $0x8] sm:$0xf]
        %v857 = vld [vmem:[%s221 + $0xc] sm:$0x1]
        %v858 = vld [vmem:[%s221 + $0x10] sm:$0xf]
        %v859 = vld [vmem:[%s221 + $0x14] sm:$0x1]
        %v860 = vld [vmem:[%s221 + $0x18] sm:$0xf]
        %v861 = vld [vmem:[%s221 + $0x1c] sm:$0x1]
        %v862 = vld [vmem:[%s221 + $0x20] sm:$0xf]
        %v863 = vld [vmem:[%s221 + $0x24] sm:$0x1]
        %v864 = vld [vmem:[%s221 + $0x28] sm:$0xf]
        %v865 = vld [vmem:[%s221 + $0x2c] sm:$0x1]
        %v866 = vld [vmem:[%s221 + $0x30] sm:$0xf]
        %v867 = vld [vmem:[%s221 + $0x34] sm:$0x1]
        %v868 = vld [vmem:[%s221 + $0x38] sm:$0xf]
        %v869 = vld [vmem:[%s221 + $0x3c] sm:$0x1]
        %v871 = vshrl.u32 %v838, 16
        %v873 = vrot.slane %v871, 4
        %v874 = vshll.u32 %v838, 16
        %v876 = vrot.slane %v874, 5
        %v877 = vor.u32 %v873, %v876
        %v878 = vrot.slane %v877, 4
        %v880 = vshll.u32 %v839, 16
        %v882 = vrot.slane %v880, 5
        %v883 = vsel %vm249, %v878, %v882
        %v885 = vshrl.u32 %v840, 16
        %v887 = vrot.slane %v885, 4
        %v888 = vshll.u32 %v840, 16
        %v890 = vrot.slane %v888, 5
        %v891 = vor.u32 %v887, %v890
        %v892 = vrot.slane %v891, 4
        %v894 = vshll.u32 %v841, 16
        %v896 = vrot.slane %v894, 5
        %v897 = vsel %vm249, %v892, %v896
        %v899 = vshrl.u32 %v842, 16
        %v901 = vrot.slane %v899, 4
        %v902 = vshll.u32 %v842, 16
        %v904 = vrot.slane %v902, 5
        %v905 = vor.u32 %v901, %v904
        %v906 = vrot.slane %v905, 4
        %v908 = vshll.u32 %v843, 16
        %v910 = vrot.slane %v908, 5
        %v911 = vsel %vm249, %v906, %v910
        %v913 = vshrl.u32 %v844, 16
        %v915 = vrot.slane %v913, 4
        %v916 = vshll.u32 %v844, 16
        %v918 = vrot.slane %v916, 5
        %v919 = vor.u32 %v915, %v918
        %v920 = vrot.slane %v919, 4
        %v922 = vshll.u32 %v845, 16
        %v924 = vrot.slane %v922, 5
        %v925 = vsel %vm249, %v920, %v924
        %v927 = vshrl.u32 %v846, 16
        %v929 = vrot.slane %v927, 4
        %v930 = vshll.u32 %v846, 16
        %v932 = vrot.slane %v930, 5
        %v933 = vor.u32 %v929, %v932
        %v934 = vrot.slane %v933, 4
        %v936 = vshll.u32 %v847, 16
        %v938 = vrot.slane %v936, 5
        %v939 = vsel %vm249, %v934, %v938
        %v941 = vshrl.u32 %v848, 16
        %v943 = vrot.slane %v941, 4
        %v944 = vshll.u32 %v848, 16
        %v946 = vrot.slane %v944, 5
        %v947 = vor.u32 %v943, %v946
        %v948 = vrot.slane %v947, 4
        %v950 = vshll.u32 %v849, 16
        %v952 = vrot.slane %v950, 5
        %v953 = vsel %vm249, %v948, %v952
        %v955 = vshrl.u32 %v850, 16
        %v957 = vrot.slane %v955, 4
        %v958 = vshll.u32 %v850, 16
        %v960 = vrot.slane %v958, 5
        %v961 = vor.u32 %v957, %v960
        %v962 = vrot.slane %v961, 4
        %v964 = vshll.u32 %v851, 16
        %v966 = vrot.slane %v964, 5
        %v967 = vsel %vm249, %v962, %v966
        %v969 = vshrl.u32 %v852, 16
        %v971 = vrot.slane %v969, 4
        %v972 = vshll.u32 %v852, 16
        %v974 = vrot.slane %v972, 5
        %v975 = vor.u32 %v971, %v974
        %v976 = vrot.slane %v975, 4
        %v978 = vshll.u32 %v853, 16
        %v980 = vrot.slane %v978, 5
        %v981 = vsel %vm249, %v976, %v980
        %v983 = vshrl.u32 %v854, 16
        %v985 = vrot.slane %v983, 4
        %v986 = vshll.u32 %v854, 16
        %v988 = vrot.slane %v986, 5
        %v989 = vor.u32 %v985, %v988
        %v990 = vrot.slane %v989, 4
        %v992 = vshll.u32 %v855, 16
        %v994 = vrot.slane %v992, 5
        %v995 = vsel %vm249, %v990, %v994
        %v997 = vshrl.u32 %v856, 16
        %v999 = vrot.slane %v997, 4
        %v1000 = vshll.u32 %v856, 16
        %v1002 = vrot.slane %v1000, 5
        %v1003 = vor.u32 %v999, %v1002
        %v1004 = vrot.slane %v1003, 4
        %v1006 = vshll.u32 %v857, 16
        %v1008 = vrot.slane %v1006, 5
        %v1009 = vsel %vm249, %v1004, %v1008
        %v1011 = vshrl.u32 %v858, 16
        %v1013 = vrot.slane %v1011, 4
        %v1014 = vshll.u32 %v858, 16
        %v1016 = vrot.slane %v1014, 5
        %v1017 = vor.u32 %v1013, %v1016
        %v1018 = vrot.slane %v1017, 4
        %v1020 = vshll.u32 %v859, 16
        %v1022 = vrot.slane %v1020, 5
        %v1023 = vsel %vm249, %v1018, %v1022
        %v1025 = vshrl.u32 %v860, 16
        %v1027 = vrot.slane %v1025, 4
        %v1028 = vshll.u32 %v860, 16
        %v1030 = vrot.slane %v1028, 5
        %v1031 = vor.u32 %v1027, %v1030
        %v1032 = vrot.slane %v1031, 4
        %v1034 = vshll.u32 %v861, 16
        %v1036 = vrot.slane %v1034, 5
        %v1037 = vsel %vm249, %v1032, %v1036
        %v1039 = vshrl.u32 %v862, 16
        %v1041 = vrot.slane %v1039, 4
        %v1042 = vshll.u32 %v862, 16
        %v1044 = vrot.slane %v1042, 5
        %v1045 = vor.u32 %v1041, %v1044
        %v1046 = vrot.slane %v1045, 4
        %v1048 = vshll.u32 %v863, 16
        %v1050 = vrot.slane %v1048, 5
        %v1051 = vsel %vm249, %v1046, %v1050
        %v1053 = vshrl.u32 %v864, 16
        %v1055 = vrot.slane %v1053, 4
        %v1056 = vshll.u32 %v864, 16
        %v1058 = vrot.slane %v1056, 5
        %v1059 = vor.u32 %v1055, %v1058
        %v1060 = vrot.slane %v1059, 4
        %v1062 = vshll.u32 %v865, 16
        %v1064 = vrot.slane %v1062, 5
        %v1065 = vsel %vm249, %v1060, %v1064
        %v1067 = vshrl.u32 %v866, 16
        %v1069 = vrot.slane %v1067, 4
        %v1070 = vshll.u32 %v866, 16
        %v1072 = vrot.slane %v1070, 5
        %v1073 = vor.u32 %v1069, %v1072
        %v1074 = vrot.slane %v1073, 4
        %v1076 = vshll.u32 %v867, 16
        %v1078 = vrot.slane %v1076, 5
        %v1079 = vsel %vm249, %v1074, %v1078
        %v1081 = vshrl.u32 %v868, 16
        %v1083 = vrot.slane %v1081, 4
        %v1084 = vshll.u32 %v868, 16
        %v1086 = vrot.slane %v1084, 5
        %v1087 = vor.u32 %v1083, %v1086
        %v1088 = vrot.slane %v1087, 4
        %v1090 = vshll.u32 %v869, 16
        %v1092 = vrot.slane %v1090, 5
        %v1093 = vsel %vm249, %v1088, %v1092
        %s1094 = scalar_lea.vmem %s1, 4
        %v1095 = vld [vmem:[%s1094] sm:$0x3]
        %v1096 = vunpack.c.l.b16 %v883
        %v1097 = vunpack.c.l.b16 %v897
        %v1098 = vunpack.c.l.b16 %v911
        %v1099 = vunpack.c.l.b16 %v925
        %v1100 = vunpack.c.l.b16 %v939
        %v1101 = vunpack.c.l.b16 %v953
        %v1102 = vunpack.c.l.b16 %v967
        %v1103 = vunpack.c.l.b16 %v981
        %v1104 = vunpack.c.l.b16 %v995
        %v1105 = vunpack.c.l.b16 %v1009
        %v1106 = vunpack.c.l.b16 %v1023
        %v1107 = vunpack.c.l.b16 %v1037
        %v1108 = vunpack.c.l.b16 %v1051
        %v1109 = vunpack.c.l.b16 %v1065
        %v1110 = vunpack.c.l.b16 %v1079
        %v1111 = vunpack.c.l.b16 %v1093
        %v1112 = vpack.c.b16 %v1097, %v1096
        %v1113 = vpack.c.b16 %v1099, %v1098
        %v1114 = vpack.c.b16 %v1101, %v1100
        %v1115 = vpack.c.b16 %v1103, %v1102
        %v1116 = vpack.c.b16 %v1105, %v1104
        %v1117 = vpack.c.b16 %v1107, %v1106
        %v1118 = vpack.c.b16 %v1109, %v1108
        %v1119 = vpack.c.b16 %v1111, %v1110
        %v1121 = vsel %vm540, %v1112, 0
        %v1124 = vsel %vm540, %v1113, 0
        %v1127 = vsel %vm540, %v1114, 0
        %v1130 = vsel %vm540, %v1115, 0
        %v1133 = vsel %vm540, %v1116, 0
        %v1136 = vsel %vm540, %v1117, 0
        %v1139 = vsel %vm540, %v1118, 0
        %v1142 = vsel %vm540, %v1119, 0
        %v1145 = vsel %vm589, %v1095, 0
        %1147 = vmatpush.bf16.msra.mxu0 0
        %1148 = vmatpush.bf16.msra.mxu0 0
        %1149 = vmatpush.bf16.msra.mxu0 0
        %1150 = vmatpush.bf16.msra.mxu0 0
        %1151 = vmatpush.bf16.msra.mxu0 0
        %1152 = vmatpush.bf16.msra.mxu0 0
        %1153 = vmatpush.bf16.msra.mxu0 0
        %1154 = vmatpush.bf16.msra.mxu0 %v1145
        %1155 = vmatmul.bf16.gmra.mxu0 %v554
        %v1156 = vpop.f32.mrf.mxu0
        %v1157 = vadd.f32 0.0, %v1156
        %v1158 = vpop.f32.mrf.mxu0
        %v1159 = vadd.f32 0.0, %v1158
        %1160 = vmatmul.bf16.gmra.mxu0 %v557
        %v1161 = vpop.f32.mrf.mxu0
        %v1162 = vadd.f32 0.0, %v1161
        %v1163 = vpop.f32.mrf.mxu0
        %v1164 = vadd.f32 0.0, %v1163
        %1165 = vmatmul.bf16.gmra.mxu0 %v560
        %v1166 = vpop.f32.mrf.mxu0
        %v1167 = vadd.f32 0.0, %v1166
        %v1168 = vpop.f32.mrf.mxu0
        %v1169 = vadd.f32 0.0, %v1168
        %1170 = vmatmul.bf16.gmra.mxu0 %v563
        %v1171 = vpop.f32.mrf.mxu0
        %v1172 = vadd.f32 0.0, %v1171
        %v1173 = vpop.f32.mrf.mxu0
        %v1174 = vadd.f32 0.0, %v1173
        %1175 = vmatmul.bf16.gmra.mxu0 %v1121
        %v1176 = vpop.f32.mrf.mxu0
        %v1177 = vadd.f32 0.0, %v1176
        %v1178 = vpop.f32.mrf.mxu0
        %v1179 = vadd.f32 0.0, %v1178
        %1180 = vmatmul.bf16.gmra.mxu0 %v1124
        %v1181 = vpop.f32.mrf.mxu0
        %v1182 = vadd.f32 0.0, %v1181
        %v1183 = vpop.f32.mrf.mxu0
        %v1184 = vadd.f32 0.0, %v1183
        %1185 = vmatmul.bf16.gmra.mxu0 %v1127
        %v1186 = vpop.f32.mrf.mxu0
        %v1187 = vadd.f32 0.0, %v1186
        %v1188 = vpop.f32.mrf.mxu0
        %v1189 = vadd.f32 0.0, %v1188
        %1190 = vmatmul.bf16.gmra.mxu0 %v1130
        %v1191 = vpop.f32.mrf.mxu0
        %v1192 = vadd.f32 0.0, %v1191
        %v1193 = vpop.f32.mrf.mxu0
        %v1194 = vadd.f32 0.0, %v1193
        %1195 = vmatmul.bf16.gmra.mxu0 %v578
        %v1196 = vpop.f32.mrf.mxu0
        %v1197 = vadd.f32 0.0, %v1196
        %v1198 = vpop.f32.mrf.mxu0
        %v1199 = vadd.f32 0.0, %v1198
        %1200 = vmatmul.bf16.gmra.mxu0 %v581
        %v1201 = vpop.f32.mrf.mxu0
        %v1202 = vadd.f32 0.0, %v1201
        %v1203 = vpop.f32.mrf.mxu0
        %v1204 = vadd.f32 0.0, %v1203
        %1205 = vmatmul.bf16.gmra.mxu0 %v584
        %v1206 = vpop.f32.mrf.mxu0
        %v1207 = vadd.f32 0.0, %v1206
        %v1208 = vpop.f32.mrf.mxu0
        %v1209 = vadd.f32 0.0, %v1208
        %1210 = vmatmul.bf16.gmra.mxu0 %v587
        %v1211 = vpop.f32.mrf.mxu0
        %v1212 = vadd.f32 0.0, %v1211
        %v1213 = vpop.f32.mrf.mxu0
        %v1214 = vadd.f32 0.0, %v1213
        %1215 = vmatmul.bf16.gmra.mxu0 %v1133
        %v1216 = vpop.f32.mrf.mxu0
        %v1217 = vadd.f32 0.0, %v1216
        %v1218 = vpop.f32.mrf.mxu0
        %v1219 = vadd.f32 0.0, %v1218
        %1220 = vmatmul.bf16.gmra.mxu0 %v1136
        %v1221 = vpop.f32.mrf.mxu0
        %v1222 = vadd.f32 0.0, %v1221
        %v1223 = vpop.f32.mrf.mxu0
        %v1224 = vadd.f32 0.0, %v1223
        %1225 = vmatmul.bf16.gmra.mxu0 %v1139
        %v1226 = vpop.f32.mrf.mxu0
        %v1227 = vadd.f32 0.0, %v1226
        %v1228 = vpop.f32.mrf.mxu0
        %v1229 = vadd.f32 0.0, %v1228
        %1230 = vmatmul.bf16.gmra.mxu0 %v1142
        %v1231 = vpop.f32.mrf.mxu0
        %v1232 = vadd.f32 0.0, %v1231
        %v1233 = vpop.f32.mrf.mxu0
        %v1234 = vadd.f32 0.0, %v1233
        %1235 = vdwg.mxu0
        %v1236 = vadd.f32 %v759, %v1157
        %v1237 = vadd.f32 %v761, %v1159
        %v1238 = vadd.f32 %v764, %v1162
        %v1239 = vadd.f32 %v766, %v1164
        %v1240 = vadd.f32 %v769, %v1167
        %v1241 = vadd.f32 %v771, %v1169
        %v1242 = vadd.f32 %v774, %v1172
        %v1243 = vadd.f32 %v776, %v1174
        %v1244 = vadd.f32 %v779, %v1177
        %v1245 = vadd.f32 %v781, %v1179
        %v1246 = vadd.f32 %v784, %v1182
        %v1247 = vadd.f32 %v786, %v1184
        %v1248 = vadd.f32 %v789, %v1187
        %v1249 = vadd.f32 %v791, %v1189
        %v1250 = vadd.f32 %v794, %v1192
        %v1251 = vadd.f32 %v796, %v1194
        %v1252 = vadd.f32 %v799, %v1197
        %v1253 = vadd.f32 %v801, %v1199
        %v1254 = vadd.f32 %v804, %v1202
        %v1255 = vadd.f32 %v806, %v1204
        %v1256 = vadd.f32 %v809, %v1207
        %v1257 = vadd.f32 %v811, %v1209
        %v1258 = vadd.f32 %v814, %v1212
        %v1259 = vadd.f32 %v816, %v1214
        %v1260 = vadd.f32 %v819, %v1217
        %v1261 = vadd.f32 %v821, %v1219
        %v1262 = vadd.f32 %v824, %v1222
        %v1263 = vadd.f32 %v826, %v1224
        %v1264 = vadd.f32 %v829, %v1227
        %v1265 = vadd.f32 %v831, %v1229
        %v1266 = vadd.f32 %v834, %v1232
        %v1267 = vadd.f32 %v836, %v1234
        %s1268 = sadd.s32 %s185, 1
        %s1269 = smul.u32 %s1268, 2
        %s1270 = smul.addr %s1269, 4
        %s1271 = scalar_lea.vmem %s182, %s1270
        %v1272 = vld [vmem:[%s1271] sm:$0xf]
        %v1273 = vld [vmem:[%s1271 + $0x8] sm:$0xf]
        %v1274 = vld [vmem:[%s1271 + $0x10] sm:$0xf]
        %v1275 = vld [vmem:[%s1271 + $0x18] sm:$0xf]
        %v1276 = vld [vmem:[%s1271 + $0x20] sm:$0xf]
        %v1277 = vld [vmem:[%s1271 + $0x28] sm:$0xf]
        %v1278 = vld [vmem:[%s1271 + $0x30] sm:$0xf]
        %v1279 = vld [vmem:[%s1271 + $0x38] sm:$0xf]
        %s1280 = sadd.s32 %s1269, 18
        %s1281 = smul.addr %s1280, 4
        %s1282 = scalar_lea.vmem %s182, %s1281
        %v1283 = vld [vmem:[%s1282] sm:$0xf]
        %v1284 = vld [vmem:[%s1282 + $0x8] sm:$0xf]
        %v1285 = vld [vmem:[%s1282 + $0x10] sm:$0xf]
        %v1286 = vld [vmem:[%s1282 + $0x18] sm:$0xf]
        %v1287 = vld [vmem:[%s1282 + $0x20] sm:$0xf]
        %v1288 = vld [vmem:[%s1282 + $0x28] sm:$0xf]
        %v1289 = vld [vmem:[%s1282 + $0x30] sm:$0xf]
        %v1290 = vld [vmem:[%s1282 + $0x38] sm:$0xf]
        %s1291 = scalar_lea.vmem %s1, 6
        %v1292 = vld [vmem:[%s1291] sm:$0x3]
        %v1309 = vunpack.c.l.b16 %v1272
        %v1310 = vunpack.c.l.b16 %v1273
        %v1311 = vunpack.c.l.b16 %v1274
        %v1312 = vunpack.c.l.b16 %v1275
        %v1313 = vunpack.c.l.b16 %v1276
        %v1314 = vunpack.c.l.b16 %v1277
        %v1315 = vunpack.c.l.b16 %v1278
        %v1316 = vunpack.c.l.b16 %v1279
        %v1317 = vunpack.c.l.b16 %v1283
        %v1318 = vunpack.c.l.b16 %v1284
        %v1319 = vunpack.c.l.b16 %v1285
        %v1320 = vunpack.c.l.b16 %v1286
        %v1321 = vunpack.c.l.b16 %v1287
        %v1322 = vunpack.c.l.b16 %v1288
        %v1323 = vunpack.c.l.b16 %v1289
        %v1324 = vunpack.c.l.b16 %v1290
        %v1325 = vpack.c.b16 %v1310, %v1309
        %v1326 = vpack.c.b16 %v1312, %v1311
        %v1327 = vpack.c.b16 %v1314, %v1313
        %v1328 = vpack.c.b16 %v1316, %v1315
        %v1329 = vpack.c.b16 %v1318, %v1317
        %v1330 = vpack.c.b16 %v1320, %v1319
        %v1331 = vpack.c.b16 %v1322, %v1321
        %v1332 = vpack.c.b16 %v1324, %v1323
        %v1334 = vsel %vm540, %v1325, 0
        %v1337 = vsel %vm540, %v1326, 0
        %v1340 = vsel %vm540, %v1327, 0
        %v1343 = vsel %vm540, %v1328, 0
        %v1346 = vsel %vm540, %v1329, 0
        %v1349 = vsel %vm540, %v1330, 0
        %v1352 = vsel %vm540, %v1331, 0
        %v1355 = vsel %vm540, %v1332, 0
        %v1358 = vsel %vm589, %v1292, 0
        %1360 = vmatpush.bf16.msra.mxu0 0
        %1361 = vmatpush.bf16.msra.mxu0 0
        %1362 = vmatpush.bf16.msra.mxu0 0
        %1363 = vmatpush.bf16.msra.mxu0 0
        %1364 = vmatpush.bf16.msra.mxu0 0
        %1365 = vmatpush.bf16.msra.mxu0 0
        %1366 = vmatpush.bf16.msra.mxu0 0
        %1367 = vmatpush.bf16.msra.mxu0 %v1358
        %1368 = vmatmul.bf16.gmra.mxu0 %v735
        %v1369 = vpop.f32.mrf.mxu0
        %v1370 = vadd.f32 0.0, %v1369
        %v1371 = vpop.f32.mrf.mxu0
        %v1372 = vadd.f32 0.0, %v1371
        %1373 = vmatmul.bf16.gmra.mxu0 %v738
        %v1374 = vpop.f32.mrf.mxu0
        %v1375 = vadd.f32 0.0, %v1374
        %v1376 = vpop.f32.mrf.mxu0
        %v1377 = vadd.f32 0.0, %v1376
        %1378 = vmatmul.bf16.gmra.mxu0 %v741
        %v1379 = vpop.f32.mrf.mxu0
        %v1380 = vadd.f32 0.0, %v1379
        %v1381 = vpop.f32.mrf.mxu0
        %v1382 = vadd.f32 0.0, %v1381
        %1383 = vmatmul.bf16.gmra.mxu0 %v744
        %v1384 = vpop.f32.mrf.mxu0
        %v1385 = vadd.f32 0.0, %v1384
        %v1386 = vpop.f32.mrf.mxu0
        %v1387 = vadd.f32 0.0, %v1386
        %1388 = vmatmul.bf16.gmra.mxu0 %v566
        %v1389 = vpop.f32.mrf.mxu0
        %v1390 = vadd.f32 0.0, %v1389
        %v1391 = vpop.f32.mrf.mxu0
        %v1392 = vadd.f32 0.0, %v1391
        %1393 = vmatmul.bf16.gmra.mxu0 %v569
        %v1394 = vpop.f32.mrf.mxu0
        %v1395 = vadd.f32 0.0, %v1394
        %v1396 = vpop.f32.mrf.mxu0
        %v1397 = vadd.f32 0.0, %v1396
        %1398 = vmatmul.bf16.gmra.mxu0 %v572
        %v1399 = vpop.f32.mrf.mxu0
        %v1400 = vadd.f32 0.0, %v1399
        %v1401 = vpop.f32.mrf.mxu0
        %v1402 = vadd.f32 0.0, %v1401
        %1403 = vmatmul.bf16.gmra.mxu0 %v575
        %v1404 = vpop.f32.mrf.mxu0
        %v1405 = vadd.f32 0.0, %v1404
        %v1406 = vpop.f32.mrf.mxu0
        %v1407 = vadd.f32 0.0, %v1406
        %1408 = vmatmul.bf16.gmra.mxu0 %v1334
        %v1409 = vpop.f32.mrf.mxu0
        %v1410 = vadd.f32 0.0, %v1409
        %v1411 = vpop.f32.mrf.mxu0
        %v1412 = vadd.f32 0.0, %v1411
        %1413 = vmatmul.bf16.gmra.mxu0 %v1337
        %v1414 = vpop.f32.mrf.mxu0
        %v1415 = vadd.f32 0.0, %v1414
        %v1416 = vpop.f32.mrf.mxu0
        %v1417 = vadd.f32 0.0, %v1416
        %1418 = vmatmul.bf16.gmra.mxu0 %v1340
        %v1419 = vpop.f32.mrf.mxu0
        %v1420 = vadd.f32 0.0, %v1419
        %v1421 = vpop.f32.mrf.mxu0
        %v1422 = vadd.f32 0.0, %v1421
        %1423 = vmatmul.bf16.gmra.mxu0 %v1343
        %v1424 = vpop.f32.mrf.mxu0
        %v1425 = vadd.f32 0.0, %v1424
        %v1426 = vpop.f32.mrf.mxu0
        %v1427 = vadd.f32 0.0, %v1426
        %1428 = vmatmul.bf16.gmra.mxu0 %v1346
        %v1429 = vpop.f32.mrf.mxu0
        %v1430 = vadd.f32 0.0, %v1429
        %v1431 = vpop.f32.mrf.mxu0
        %v1432 = vadd.f32 0.0, %v1431
        %1433 = vmatmul.bf16.gmra.mxu0 %v1349
        %v1434 = vpop.f32.mrf.mxu0
        %v1435 = vadd.f32 0.0, %v1434
        %v1436 = vpop.f32.mrf.mxu0
        %v1437 = vadd.f32 0.0, %v1436
        %1438 = vmatmul.bf16.gmra.mxu0 %v1352
        %v1439 = vpop.f32.mrf.mxu0
        %v1440 = vadd.f32 0.0, %v1439
        %v1441 = vpop.f32.mrf.mxu0
        %v1442 = vadd.f32 0.0, %v1441
        %1443 = vmatmul.bf16.gmra.mxu0 %v1355
        %v1444 = vpop.f32.mrf.mxu0
        %v1445 = vadd.f32 0.0, %v1444
        %v1446 = vpop.f32.mrf.mxu0
        %v1447 = vadd.f32 0.0, %v1446
        %1448 = vdwg.mxu0
        %v1449 = vadd.f32 %v1236, %v1370
        %v1450 = vadd.f32 %v1237, %v1372
        %v1451 = vadd.f32 %v1238, %v1375
        %v1452 = vadd.f32 %v1239, %v1377
        %v1453 = vadd.f32 %v1240, %v1380
        %v1454 = vadd.f32 %v1241, %v1382
        %v1455 = vadd.f32 %v1242, %v1385
        %v1456 = vadd.f32 %v1243, %v1387
        %v1457 = vadd.f32 %v1244, %v1390
        %v1458 = vadd.f32 %v1245, %v1392
        %v1459 = vadd.f32 %v1246, %v1395
        %v1460 = vadd.f32 %v1247, %v1397
        %v1461 = vadd.f32 %v1248, %v1400
        %v1462 = vadd.f32 %v1249, %v1402
        %v1463 = vadd.f32 %v1250, %v1405
        %v1464 = vadd.f32 %v1251, %v1407
        %v1465 = vadd.f32 %v1252, %v1410
        %v1466 = vadd.f32 %v1253, %v1412
        %v1467 = vadd.f32 %v1254, %v1415
        %v1468 = vadd.f32 %v1255, %v1417
        %v1469 = vadd.f32 %v1256, %v1420
        %v1470 = vadd.f32 %v1257, %v1422
        %v1471 = vadd.f32 %v1258, %v1425
        %v1472 = vadd.f32 %v1259, %v1427
        %v1473 = vadd.f32 %v1260, %v1430
        %v1474 = vadd.f32 %v1261, %v1432
        %v1475 = vadd.f32 %v1262, %v1435
        %v1476 = vadd.f32 %v1263, %v1437
        %v1477 = vadd.f32 %v1264, %v1440
        %v1478 = vadd.f32 %v1265, %v1442
        %v1479 = vadd.f32 %v1266, %v1445
        %v1480 = vadd.f32 %v1267, %v1447
        %v1481 = vld [vmem:[%s1271] sm:$0xf]
        %v1482 = vld [vmem:[%s1271 + $0x4] sm:$0x1]
        %v1483 = vld [vmem:[%s1271 + $0x8] sm:$0xf]
        %v1484 = vld [vmem:[%s1271 + $0xc] sm:$0x1]
        %v1485 = vld [vmem:[%s1271 + $0x10] sm:$0xf]
        %v1486 = vld [vmem:[%s1271 + $0x14] sm:$0x1]
        %v1487 = vld [vmem:[%s1271 + $0x18] sm:$0xf]
        %v1488 = vld [vmem:[%s1271 + $0x1c] sm:$0x1]
        %v1489 = vld [vmem:[%s1271 + $0x20] sm:$0xf]
        %v1490 = vld [vmem:[%s1271 + $0x24] sm:$0x1]
        %v1491 = vld [vmem:[%s1271 + $0x28] sm:$0xf]
        %v1492 = vld [vmem:[%s1271 + $0x2c] sm:$0x1]
        %v1493 = vld [vmem:[%s1271 + $0x30] sm:$0xf]
        %v1494 = vld [vmem:[%s1271 + $0x34] sm:$0x1]
        %v1495 = vld [vmem:[%s1271 + $0x38] sm:$0xf]
        %v1496 = vld [vmem:[%s1271 + $0x3c] sm:$0x1]
        %v1498 = vshrl.u32 %v1481, 16
        %v1500 = vrot.slane %v1498, 4
        %v1501 = vshll.u32 %v1481, 16
        %v1503 = vrot.slane %v1501, 5
        %v1504 = vor.u32 %v1500, %v1503
        %v1505 = vrot.slane %v1504, 4
        %v1507 = vshll.u32 %v1482, 16
        %v1509 = vrot.slane %v1507, 5
        %v1510 = vsel %vm249, %v1505, %v1509
        %v1512 = vshrl.u32 %v1483, 16
        %v1514 = vrot.slane %v1512, 4
        %v1515 = vshll.u32 %v1483, 16
        %v1517 = vrot.slane %v1515, 5
        %v1518 = vor.u32 %v1514, %v1517
        %v1519 = vrot.slane %v1518, 4
        %v1521 = vshll.u32 %v1484, 16
        %v1523 = vrot.slane %v1521, 5
        %v1524 = vsel %vm249, %v1519, %v1523
        %v1526 = vshrl.u32 %v1485, 16
        %v1528 = vrot.slane %v1526, 4
        %v1529 = vshll.u32 %v1485, 16
        %v1531 = vrot.slane %v1529, 5
        %v1532 = vor.u32 %v1528, %v1531
        %v1533 = vrot.slane %v1532, 4
        %v1535 = vshll.u32 %v1486, 16
        %v1537 = vrot.slane %v1535, 5
        %v1538 = vsel %vm249, %v1533, %v1537
        %v1540 = vshrl.u32 %v1487, 16
        %v1542 = vrot.slane %v1540, 4
        %v1543 = vshll.u32 %v1487, 16
        %v1545 = vrot.slane %v1543, 5
        %v1546 = vor.u32 %v1542, %v1545
        %v1547 = vrot.slane %v1546, 4
        %v1549 = vshll.u32 %v1488, 16
        %v1551 = vrot.slane %v1549, 5
        %v1552 = vsel %vm249, %v1547, %v1551
        %v1554 = vshrl.u32 %v1489, 16
        %v1556 = vrot.slane %v1554, 4
        %v1557 = vshll.u32 %v1489, 16
        %v1559 = vrot.slane %v1557, 5
        %v1560 = vor.u32 %v1556, %v1559
        %v1561 = vrot.slane %v1560, 4
        %v1563 = vshll.u32 %v1490, 16
        %v1565 = vrot.slane %v1563, 5
        %v1566 = vsel %vm249, %v1561, %v1565
        %v1568 = vshrl.u32 %v1491, 16
        %v1570 = vrot.slane %v1568, 4
        %v1571 = vshll.u32 %v1491, 16
        %v1573 = vrot.slane %v1571, 5
        %v1574 = vor.u32 %v1570, %v1573
        %v1575 = vrot.slane %v1574, 4
        %v1577 = vshll.u32 %v1492, 16
        %v1579 = vrot.slane %v1577, 5
        %v1580 = vsel %vm249, %v1575, %v1579
        %v1582 = vshrl.u32 %v1493, 16
        %v1584 = vrot.slane %v1582, 4
        %v1585 = vshll.u32 %v1493, 16
        %v1587 = vrot.slane %v1585, 5
        %v1588 = vor.u32 %v1584, %v1587
        %v1589 = vrot.slane %v1588, 4
        %v1591 = vshll.u32 %v1494, 16
        %v1593 = vrot.slane %v1591, 5
        %v1594 = vsel %vm249, %v1589, %v1593
        %v1596 = vshrl.u32 %v1495, 16
        %v1598 = vrot.slane %v1596, 4
        %v1599 = vshll.u32 %v1495, 16
        %v1601 = vrot.slane %v1599, 5
        %v1602 = vor.u32 %v1598, %v1601
        %v1603 = vrot.slane %v1602, 4
        %v1605 = vshll.u32 %v1496, 16
        %v1607 = vrot.slane %v1605, 5
        %v1608 = vsel %vm249, %v1603, %v1607
        %s1609 = scalar_lea.vmem %s1, 8
        %v1610 = vld [vmem:[%s1609] sm:$0x3]
        %v1611 = vunpack.c.l.b16 %v1510
        %v1612 = vunpack.c.l.b16 %v1524
        %v1613 = vunpack.c.l.b16 %v1538
        %v1614 = vunpack.c.l.b16 %v1552
        %v1615 = vunpack.c.l.b16 %v1566
        %v1616 = vunpack.c.l.b16 %v1580
        %v1617 = vunpack.c.l.b16 %v1594
        %v1618 = vunpack.c.l.b16 %v1608
        %v1619 = vpack.c.b16 %v1612, %v1611
        %v1620 = vpack.c.b16 %v1614, %v1613
        %v1621 = vpack.c.b16 %v1616, %v1615
        %v1622 = vpack.c.b16 %v1618, %v1617
        %v1624 = vsel %vm540, %v1619, 0
        %v1627 = vsel %vm540, %v1620, 0
        %v1630 = vsel %vm540, %v1621, 0
        %v1633 = vsel %vm540, %v1622, 0
        %v1636 = vsel %vm589, %v1610, 0
        %1638 = vmatpush.bf16.msra.mxu0 0
        %1639 = vmatpush.bf16.msra.mxu0 0
        %1640 = vmatpush.bf16.msra.mxu0 0
        %1641 = vmatpush.bf16.msra.mxu0 0
        %1642 = vmatpush.bf16.msra.mxu0 0
        %1643 = vmatpush.bf16.msra.mxu0 0
        %1644 = vmatpush.bf16.msra.mxu0 0
        %1645 = vmatpush.bf16.msra.mxu0 %v1636
        %1646 = vmatmul.bf16.gmra.mxu0 %v566
        %v1647 = vpop.f32.mrf.mxu0
        %v1648 = vadd.f32 0.0, %v1647
        %v1649 = vpop.f32.mrf.mxu0
        %v1650 = vadd.f32 0.0, %v1649
        %1651 = vmatmul.bf16.gmra.mxu0 %v569
        %v1652 = vpop.f32.mrf.mxu0
        %v1653 = vadd.f32 0.0, %v1652
        %v1654 = vpop.f32.mrf.mxu0
        %v1655 = vadd.f32 0.0, %v1654
        %1656 = vmatmul.bf16.gmra.mxu0 %v572
        %v1657 = vpop.f32.mrf.mxu0
        %v1658 = vadd.f32 0.0, %v1657
        %v1659 = vpop.f32.mrf.mxu0
        %v1660 = vadd.f32 0.0, %v1659
        %1661 = vmatmul.bf16.gmra.mxu0 %v575
        %v1662 = vpop.f32.mrf.mxu0
        %v1663 = vadd.f32 0.0, %v1662
        %v1664 = vpop.f32.mrf.mxu0
        %v1665 = vadd.f32 0.0, %v1664
        %1666 = vmatmul.bf16.gmra.mxu0 %v578
        %v1667 = vpop.f32.mrf.mxu0
        %v1668 = vadd.f32 0.0, %v1667
        %v1669 = vpop.f32.mrf.mxu0
        %v1670 = vadd.f32 0.0, %v1669
        %1671 = vmatmul.bf16.gmra.mxu0 %v581
        %v1672 = vpop.f32.mrf.mxu0
        %v1673 = vadd.f32 0.0, %v1672
        %v1674 = vpop.f32.mrf.mxu0
        %v1675 = vadd.f32 0.0, %v1674
        %1676 = vmatmul.bf16.gmra.mxu0 %v584
        %v1677 = vpop.f32.mrf.mxu0
        %v1678 = vadd.f32 0.0, %v1677
        %v1679 = vpop.f32.mrf.mxu0
        %v1680 = vadd.f32 0.0, %v1679
        %1681 = vmatmul.bf16.gmra.mxu0 %v587
        %v1682 = vpop.f32.mrf.mxu0
        %v1683 = vadd.f32 0.0, %v1682
        %v1684 = vpop.f32.mrf.mxu0
        %v1685 = vadd.f32 0.0, %v1684
        %1686 = vmatmul.bf16.gmra.mxu0 %v1346
        %v1687 = vpop.f32.mrf.mxu0
        %v1688 = vadd.f32 0.0, %v1687
        %v1689 = vpop.f32.mrf.mxu0
        %v1690 = vadd.f32 0.0, %v1689
        %1691 = vmatmul.bf16.gmra.mxu0 %v1349
        %v1692 = vpop.f32.mrf.mxu0
        %v1693 = vadd.f32 0.0, %v1692
        %v1694 = vpop.f32.mrf.mxu0
        %v1695 = vadd.f32 0.0, %v1694
        %1696 = vmatmul.bf16.gmra.mxu0 %v1352
        %v1697 = vpop.f32.mrf.mxu0
        %v1698 = vadd.f32 0.0, %v1697
        %v1699 = vpop.f32.mrf.mxu0
        %v1700 = vadd.f32 0.0, %v1699
        %1701 = vmatmul.bf16.gmra.mxu0 %v1355
        %v1702 = vpop.f32.mrf.mxu0
        %v1703 = vadd.f32 0.0, %v1702
        %v1704 = vpop.f32.mrf.mxu0
        %v1705 = vadd.f32 0.0, %v1704
        %1706 = vmatmul.bf16.gmra.mxu0 %v1624
        %v1707 = vpop.f32.mrf.mxu0
        %v1708 = vadd.f32 0.0, %v1707
        %v1709 = vpop.f32.mrf.mxu0
        %v1710 = vadd.f32 0.0, %v1709
        %1711 = vmatmul.bf16.gmra.mxu0 %v1627
        %v1712 = vpop.f32.mrf.mxu0
        %v1713 = vadd.f32 0.0, %v1712
        %v1714 = vpop.f32.mrf.mxu0
        %v1715 = vadd.f32 0.0, %v1714
        %1716 = vmatmul.bf16.gmra.mxu0 %v1630
        %v1717 = vpop.f32.mrf.mxu0
        %v1718 = vadd.f32 0.0, %v1717
        %v1719 = vpop.f32.mrf.mxu0
        %v1720 = vadd.f32 0.0, %v1719
        %1721 = vmatmul.bf16.gmra.mxu0 %v1633
        %v1722 = vpop.f32.mrf.mxu0
        %v1723 = vadd.f32 0.0, %v1722
        %v1724 = vpop.f32.mrf.mxu0
        %v1725 = vadd.f32 0.0, %v1724
        %1726 = vdwg.mxu0
        %v1727 = vadd.f32 %v1449, %v1648
        %v1728 = vadd.f32 %v1450, %v1650
        %v1729 = vadd.f32 %v1451, %v1653
        %v1730 = vadd.f32 %v1452, %v1655
        %v1731 = vadd.f32 %v1453, %v1658
        %v1732 = vadd.f32 %v1454, %v1660
        %v1733 = vadd.f32 %v1455, %v1663
        %v1734 = vadd.f32 %v1456, %v1665
        %v1735 = vadd.f32 %v1457, %v1668
        %v1736 = vadd.f32 %v1458, %v1670
        %v1737 = vadd.f32 %v1459, %v1673
        %v1738 = vadd.f32 %v1460, %v1675
        %v1739 = vadd.f32 %v1461, %v1678
        %v1740 = vadd.f32 %v1462, %v1680
        %v1741 = vadd.f32 %v1463, %v1683
        %v1742 = vadd.f32 %v1464, %v1685
        %v1743 = vadd.f32 %v1465, %v1688
        %v1744 = vadd.f32 %v1466, %v1690
        %v1745 = vadd.f32 %v1467, %v1693
        %v1746 = vadd.f32 %v1468, %v1695
        %v1747 = vadd.f32 %v1469, %v1698
        %v1748 = vadd.f32 %v1470, %v1700
        %v1749 = vadd.f32 %v1471, %v1703
        %v1750 = vadd.f32 %v1472, %v1705
        %v1751 = vadd.f32 %v1473, %v1708
        %v1752 = vadd.f32 %v1474, %v1710
        %v1753 = vadd.f32 %v1475, %v1713
        %v1754 = vadd.f32 %v1476, %v1715
        %v1755 = vadd.f32 %v1477, %v1718
        %v1756 = vadd.f32 %v1478, %v1720
        %v1757 = vadd.f32 %v1479, %v1723
        %v1758 = vadd.f32 %v1480, %v1725
        %v1759 = vld [vmem:[%s1282] sm:$0xf]
        %v1760 = vld [vmem:[%s1282 + $0x4] sm:$0x1]
        %v1761 = vld [vmem:[%s1282 + $0x8] sm:$0xf]
        %v1762 = vld [vmem:[%s1282 + $0xc] sm:$0x1]
        %v1763 = vld [vmem:[%s1282 + $0x10] sm:$0xf]
        %v1764 = vld [vmem:[%s1282 + $0x14] sm:$0x1]
        %v1765 = vld [vmem:[%s1282 + $0x18] sm:$0xf]
        %v1766 = vld [vmem:[%s1282 + $0x1c] sm:$0x1]
        %v1767 = vld [vmem:[%s1282 + $0x20] sm:$0xf]
        %v1768 = vld [vmem:[%s1282 + $0x24] sm:$0x1]
        %v1769 = vld [vmem:[%s1282 + $0x28] sm:$0xf]
        %v1770 = vld [vmem:[%s1282 + $0x2c] sm:$0x1]
        %v1771 = vld [vmem:[%s1282 + $0x30] sm:$0xf]
        %v1772 = vld [vmem:[%s1282 + $0x34] sm:$0x1]
        %v1773 = vld [vmem:[%s1282 + $0x38] sm:$0xf]
        %v1774 = vld [vmem:[%s1282 + $0x3c] sm:$0x1]
        %v1776 = vshrl.u32 %v1759, 16
        %v1778 = vrot.slane %v1776, 4
        %v1779 = vshll.u32 %v1759, 16
        %v1781 = vrot.slane %v1779, 5
        %v1782 = vor.u32 %v1778, %v1781
        %v1783 = vrot.slane %v1782, 4
        %v1785 = vshll.u32 %v1760, 16
        %v1787 = vrot.slane %v1785, 5
        %v1788 = vsel %vm249, %v1783, %v1787
        %v1790 = vshrl.u32 %v1761, 16
        %v1792 = vrot.slane %v1790, 4
        %v1793 = vshll.u32 %v1761, 16
        %v1795 = vrot.slane %v1793, 5
        %v1796 = vor.u32 %v1792, %v1795
        %v1797 = vrot.slane %v1796, 4
        %v1799 = vshll.u32 %v1762, 16
        %v1801 = vrot.slane %v1799, 5
        %v1802 = vsel %vm249, %v1797, %v1801
        %v1804 = vshrl.u32 %v1763, 16
        %v1806 = vrot.slane %v1804, 4
        %v1807 = vshll.u32 %v1763, 16
        %v1809 = vrot.slane %v1807, 5
        %v1810 = vor.u32 %v1806, %v1809
        %v1811 = vrot.slane %v1810, 4
        %v1813 = vshll.u32 %v1764, 16
        %v1815 = vrot.slane %v1813, 5
        %v1816 = vsel %vm249, %v1811, %v1815
        %v1818 = vshrl.u32 %v1765, 16
        %v1820 = vrot.slane %v1818, 4
        %v1821 = vshll.u32 %v1765, 16
        %v1823 = vrot.slane %v1821, 5
        %v1824 = vor.u32 %v1820, %v1823
        %v1825 = vrot.slane %v1824, 4
        %v1827 = vshll.u32 %v1766, 16
        %v1829 = vrot.slane %v1827, 5
        %v1830 = vsel %vm249, %v1825, %v1829
        %v1832 = vshrl.u32 %v1767, 16
        %v1834 = vrot.slane %v1832, 4
        %v1835 = vshll.u32 %v1767, 16
        %v1837 = vrot.slane %v1835, 5
        %v1838 = vor.u32 %v1834, %v1837
        %v1839 = vrot.slane %v1838, 4
        %v1841 = vshll.u32 %v1768, 16
        %v1843 = vrot.slane %v1841, 5
        %v1844 = vsel %vm249, %v1839, %v1843
        %v1846 = vshrl.u32 %v1769, 16
        %v1848 = vrot.slane %v1846, 4
        %v1849 = vshll.u32 %v1769, 16
        %v1851 = vrot.slane %v1849, 5
        %v1852 = vor.u32 %v1848, %v1851
        %v1853 = vrot.slane %v1852, 4
        %v1855 = vshll.u32 %v1770, 16
        %v1857 = vrot.slane %v1855, 5
        %v1858 = vsel %vm249, %v1853, %v1857
        %v1860 = vshrl.u32 %v1771, 16
        %v1862 = vrot.slane %v1860, 4
        %v1863 = vshll.u32 %v1771, 16
        %v1865 = vrot.slane %v1863, 5
        %v1866 = vor.u32 %v1862, %v1865
        %v1867 = vrot.slane %v1866, 4
        %v1869 = vshll.u32 %v1772, 16
        %v1871 = vrot.slane %v1869, 5
        %v1872 = vsel %vm249, %v1867, %v1871
        %v1874 = vshrl.u32 %v1773, 16
        %v1876 = vrot.slane %v1874, 4
        %v1877 = vshll.u32 %v1773, 16
        %v1879 = vrot.slane %v1877, 5
        %v1880 = vor.u32 %v1876, %v1879
        %v1881 = vrot.slane %v1880, 4
        %v1883 = vshll.u32 %v1774, 16
        %v1885 = vrot.slane %v1883, 5
        %v1886 = vsel %vm249, %v1881, %v1885
        %s1887 = scalar_lea.vmem %s1, 10
        %v1888 = vld [vmem:[%s1887] sm:$0x3]
        %v1889 = vunpack.c.l.b16 %v1788
        %v1890 = vunpack.c.l.b16 %v1802
        %v1891 = vunpack.c.l.b16 %v1816
        %v1892 = vunpack.c.l.b16 %v1830
        %v1893 = vunpack.c.l.b16 %v1844
        %v1894 = vunpack.c.l.b16 %v1858
        %v1895 = vunpack.c.l.b16 %v1872
        %v1896 = vunpack.c.l.b16 %v1886
        %v1897 = vpack.c.b16 %v1890, %v1889
        %v1898 = vpack.c.b16 %v1892, %v1891
        %v1899 = vpack.c.b16 %v1894, %v1893
        %v1900 = vpack.c.b16 %v1896, %v1895
        %v1902 = vsel %vm540, %v1897, 0
        %v1905 = vsel %vm540, %v1898, 0
        %v1908 = vsel %vm540, %v1899, 0
        %v1911 = vsel %vm540, %v1900, 0
        %v1914 = vsel %vm589, %v1888, 0
        %1916 = vmatpush.bf16.msra.mxu0 0
        %1917 = vmatpush.bf16.msra.mxu0 0
        %1918 = vmatpush.bf16.msra.mxu0 0
        %1919 = vmatpush.bf16.msra.mxu0 0
        %1920 = vmatpush.bf16.msra.mxu0 0
        %1921 = vmatpush.bf16.msra.mxu0 0
        %1922 = vmatpush.bf16.msra.mxu0 0
        %1923 = vmatpush.bf16.msra.mxu0 %v1914
        %1924 = vmatmul.bf16.gmra.mxu0 %v578
        %v1925 = vpop.f32.mrf.mxu0
        %v1926 = vadd.f32 0.0, %v1925
        %v1927 = vpop.f32.mrf.mxu0
        %v1928 = vadd.f32 0.0, %v1927
        %1929 = vmatmul.bf16.gmra.mxu0 %v581
        %v1930 = vpop.f32.mrf.mxu0
        %v1931 = vadd.f32 0.0, %v1930
        %v1932 = vpop.f32.mrf.mxu0
        %v1933 = vadd.f32 0.0, %v1932
        %1934 = vmatmul.bf16.gmra.mxu0 %v584
        %v1935 = vpop.f32.mrf.mxu0
        %v1936 = vadd.f32 0.0, %v1935
        %v1937 = vpop.f32.mrf.mxu0
        %v1938 = vadd.f32 0.0, %v1937
        %1939 = vmatmul.bf16.gmra.mxu0 %v587
        %v1940 = vpop.f32.mrf.mxu0
        %v1941 = vadd.f32 0.0, %v1940
        %v1942 = vpop.f32.mrf.mxu0
        %v1943 = vadd.f32 0.0, %v1942
        %1944 = vmatmul.bf16.gmra.mxu0 %v1133
        %v1945 = vpop.f32.mrf.mxu0
        %v1946 = vadd.f32 0.0, %v1945
        %v1947 = vpop.f32.mrf.mxu0
        %v1948 = vadd.f32 0.0, %v1947
        %1949 = vmatmul.bf16.gmra.mxu0 %v1136
        %v1950 = vpop.f32.mrf.mxu0
        %v1951 = vadd.f32 0.0, %v1950
        %v1952 = vpop.f32.mrf.mxu0
        %v1953 = vadd.f32 0.0, %v1952
        %1954 = vmatmul.bf16.gmra.mxu0 %v1139
        %v1955 = vpop.f32.mrf.mxu0
        %v1956 = vadd.f32 0.0, %v1955
        %v1957 = vpop.f32.mrf.mxu0
        %v1958 = vadd.f32 0.0, %v1957
        %1959 = vmatmul.bf16.gmra.mxu0 %v1142
        %v1960 = vpop.f32.mrf.mxu0
        %v1961 = vadd.f32 0.0, %v1960
        %v1962 = vpop.f32.mrf.mxu0
        %v1963 = vadd.f32 0.0, %v1962
        %1964 = vmatmul.bf16.gmra.mxu0 %v1624
        %v1965 = vpop.f32.mrf.mxu0
        %v1966 = vadd.f32 0.0, %v1965
        %v1967 = vpop.f32.mrf.mxu0
        %v1968 = vadd.f32 0.0, %v1967
        %1969 = vmatmul.bf16.gmra.mxu0 %v1627
        %v1970 = vpop.f32.mrf.mxu0
        %v1971 = vadd.f32 0.0, %v1970
        %v1972 = vpop.f32.mrf.mxu0
        %v1973 = vadd.f32 0.0, %v1972
        %1974 = vmatmul.bf16.gmra.mxu0 %v1630
        %v1975 = vpop.f32.mrf.mxu0
        %v1976 = vadd.f32 0.0, %v1975
        %v1977 = vpop.f32.mrf.mxu0
        %v1978 = vadd.f32 0.0, %v1977
        %1979 = vmatmul.bf16.gmra.mxu0 %v1633
        %v1980 = vpop.f32.mrf.mxu0
        %v1981 = vadd.f32 0.0, %v1980
        %v1982 = vpop.f32.mrf.mxu0
        %v1983 = vadd.f32 0.0, %v1982
        %1984 = vmatmul.bf16.gmra.mxu0 %v1902
        %v1985 = vpop.f32.mrf.mxu0
        %v1986 = vadd.f32 0.0, %v1985
        %v1987 = vpop.f32.mrf.mxu0
        %v1988 = vadd.f32 0.0, %v1987
        %1989 = vmatmul.bf16.gmra.mxu0 %v1905
        %v1990 = vpop.f32.mrf.mxu0
        %v1991 = vadd.f32 0.0, %v1990
        %v1992 = vpop.f32.mrf.mxu0
        %v1993 = vadd.f32 0.0, %v1992
        %1994 = vmatmul.bf16.gmra.mxu0 %v1908
        %v1995 = vpop.f32.mrf.mxu0
        %v1996 = vadd.f32 0.0, %v1995
        %v1997 = vpop.f32.mrf.mxu0
        %v1998 = vadd.f32 0.0, %v1997
        %1999 = vmatmul.bf16.gmra.mxu0 %v1911
        %v2000 = vpop.f32.mrf.mxu0
        %v2001 = vadd.f32 0.0, %v2000
        %v2002 = vpop.f32.mrf.mxu0
        %v2003 = vadd.f32 0.0, %v2002
        %2004 = vdwg.mxu0
        %v2005 = vadd.f32 %v1727, %v1926
        %v2006 = vadd.f32 %v1728, %v1928
        %v2007 = vadd.f32 %v1729, %v1931
        %v2008 = vadd.f32 %v1730, %v1933
        %v2009 = vadd.f32 %v1731, %v1936
        %v2010 = vadd.f32 %v1732, %v1938
        %v2011 = vadd.f32 %v1733, %v1941
        %v2012 = vadd.f32 %v1734, %v1943
        %v2013 = vadd.f32 %v1735, %v1946
        %v2014 = vadd.f32 %v1736, %v1948
        %v2015 = vadd.f32 %v1737, %v1951
        %v2016 = vadd.f32 %v1738, %v1953
        %v2017 = vadd.f32 %v1739, %v1956
        %v2018 = vadd.f32 %v1740, %v1958
        %v2019 = vadd.f32 %v1741, %v1961
        %v2020 = vadd.f32 %v1742, %v1963
        %v2021 = vadd.f32 %v1743, %v1966
        %v2022 = vadd.f32 %v1744, %v1968
        %v2023 = vadd.f32 %v1745, %v1971
        %v2024 = vadd.f32 %v1746, %v1973
        %v2025 = vadd.f32 %v1747, %v1976
        %v2026 = vadd.f32 %v1748, %v1978
        %v2027 = vadd.f32 %v1749, %v1981
        %v2028 = vadd.f32 %v1750, %v1983
        %v2029 = vadd.f32 %v1751, %v1986
        %v2030 = vadd.f32 %v1752, %v1988
        %v2031 = vadd.f32 %v1753, %v1991
        %v2032 = vadd.f32 %v1754, %v1993
        %v2033 = vadd.f32 %v1755, %v1996
        %v2034 = vadd.f32 %v1756, %v1998
        %v2035 = vadd.f32 %v1757, %v2001
        %v2036 = vadd.f32 %v1758, %v2003
        %s2037 = sadd.s32 %s1269, 36
        %s2038 = smul.addr %s2037, 4
        %s2039 = scalar_lea.vmem %s182, %s2038
        %v2040 = vld [vmem:[%s2039] sm:$0xf]
        %v2041 = vld [vmem:[%s2039 + $0x8] sm:$0xf]
        %v2042 = vld [vmem:[%s2039 + $0x10] sm:$0xf]
        %v2043 = vld [vmem:[%s2039 + $0x18] sm:$0xf]
        %v2044 = vld [vmem:[%s2039 + $0x20] sm:$0xf]
        %v2045 = vld [vmem:[%s2039 + $0x28] sm:$0xf]
        %v2046 = vld [vmem:[%s2039 + $0x30] sm:$0xf]
        %v2047 = vld [vmem:[%s2039 + $0x38] sm:$0xf]
        %s2048 = sadd.s32 %s1269, 54
        %s2049 = smul.addr %s2048, 4
        %s2050 = scalar_lea.vmem %s182, %s2049
        %v2051 = vld [vmem:[%s2050] sm:$0xf]
        %v2052 = vld [vmem:[%s2050 + $0x8] sm:$0xf]
        %v2053 = vld [vmem:[%s2050 + $0x10] sm:$0xf]
        %v2054 = vld [vmem:[%s2050 + $0x18] sm:$0xf]
        %v2055 = vld [vmem:[%s2050 + $0x20] sm:$0xf]
        %v2056 = vld [vmem:[%s2050 + $0x28] sm:$0xf]
        %v2057 = vld [vmem:[%s2050 + $0x30] sm:$0xf]
        %v2058 = vld [vmem:[%s2050 + $0x38] sm:$0xf]
        %s2059 = scalar_lea.vmem %s1, 12
        %v2060 = vld [vmem:[%s2059] sm:$0x3]
        %v2077 = vunpack.c.l.b16 %v2040
        %v2078 = vunpack.c.l.b16 %v2041
        %v2079 = vunpack.c.l.b16 %v2042
        %v2080 = vunpack.c.l.b16 %v2043
        %v2081 = vunpack.c.l.b16 %v2044
        %v2082 = vunpack.c.l.b16 %v2045
        %v2083 = vunpack.c.l.b16 %v2046
        %v2084 = vunpack.c.l.b16 %v2047
        %v2085 = vunpack.c.l.b16 %v2051
        %v2086 = vunpack.c.l.b16 %v2052
        %v2087 = vunpack.c.l.b16 %v2053
        %v2088 = vunpack.c.l.b16 %v2054
        %v2089 = vunpack.c.l.b16 %v2055
        %v2090 = vunpack.c.l.b16 %v2056
        %v2091 = vunpack.c.l.b16 %v2057
        %v2092 = vunpack.c.l.b16 %v2058
        %v2093 = vpack.c.b16 %v2078, %v2077
        %v2094 = vpack.c.b16 %v2080, %v2079
        %v2095 = vpack.c.b16 %v2082, %v2081
        %v2096 = vpack.c.b16 %v2084, %v2083
        %v2097 = vpack.c.b16 %v2086, %v2085
        %v2098 = vpack.c.b16 %v2088, %v2087
        %v2099 = vpack.c.b16 %v2090, %v2089
        %v2100 = vpack.c.b16 %v2092, %v2091
        %v2102 = vsel %vm540, %v2093, 0
        %v2105 = vsel %vm540, %v2094, 0
        %v2108 = vsel %vm540, %v2095, 0
        %v2111 = vsel %vm540, %v2096, 0
        %v2114 = vsel %vm540, %v2097, 0
        %v2117 = vsel %vm540, %v2098, 0
        %v2120 = vsel %vm540, %v2099, 0
        %v2123 = vsel %vm540, %v2100, 0
        %v2126 = vsel %vm589, %v2060, 0
        %2128 = vmatpush.bf16.msra.mxu0 0
        %2129 = vmatpush.bf16.msra.mxu0 0
        %2130 = vmatpush.bf16.msra.mxu0 0
        %2131 = vmatpush.bf16.msra.mxu0 0
        %2132 = vmatpush.bf16.msra.mxu0 0
        %2133 = vmatpush.bf16.msra.mxu0 0
        %2134 = vmatpush.bf16.msra.mxu0 0
        %2135 = vmatpush.bf16.msra.mxu0 %v2126
        %2136 = vmatmul.bf16.gmra.mxu0 %v1334
        %v2137 = vpop.f32.mrf.mxu0
        %v2138 = vadd.f32 0.0, %v2137
        %v2139 = vpop.f32.mrf.mxu0
        %v2140 = vadd.f32 0.0, %v2139
        %2141 = vmatmul.bf16.gmra.mxu0 %v1337
        %v2142 = vpop.f32.mrf.mxu0
        %v2143 = vadd.f32 0.0, %v2142
        %v2144 = vpop.f32.mrf.mxu0
        %v2145 = vadd.f32 0.0, %v2144
        %2146 = vmatmul.bf16.gmra.mxu0 %v1340
        %v2147 = vpop.f32.mrf.mxu0
        %v2148 = vadd.f32 0.0, %v2147
        %v2149 = vpop.f32.mrf.mxu0
        %v2150 = vadd.f32 0.0, %v2149
        %2151 = vmatmul.bf16.gmra.mxu0 %v1343
        %v2152 = vpop.f32.mrf.mxu0
        %v2153 = vadd.f32 0.0, %v2152
        %v2154 = vpop.f32.mrf.mxu0
        %v2155 = vadd.f32 0.0, %v2154
        %2156 = vmatmul.bf16.gmra.mxu0 %v1346
        %v2157 = vpop.f32.mrf.mxu0
        %v2158 = vadd.f32 0.0, %v2157
        %v2159 = vpop.f32.mrf.mxu0
        %v2160 = vadd.f32 0.0, %v2159
        %2161 = vmatmul.bf16.gmra.mxu0 %v1349
        %v2162 = vpop.f32.mrf.mxu0
        %v2163 = vadd.f32 0.0, %v2162
        %v2164 = vpop.f32.mrf.mxu0
        %v2165 = vadd.f32 0.0, %v2164
        %2166 = vmatmul.bf16.gmra.mxu0 %v1352
        %v2167 = vpop.f32.mrf.mxu0
        %v2168 = vadd.f32 0.0, %v2167
        %v2169 = vpop.f32.mrf.mxu0
        %v2170 = vadd.f32 0.0, %v2169
        %2171 = vmatmul.bf16.gmra.mxu0 %v1355
        %v2172 = vpop.f32.mrf.mxu0
        %v2173 = vadd.f32 0.0, %v2172
        %v2174 = vpop.f32.mrf.mxu0
        %v2175 = vadd.f32 0.0, %v2174
        %2176 = vmatmul.bf16.gmra.mxu0 %v2102
        %v2177 = vpop.f32.mrf.mxu0
        %v2178 = vadd.f32 0.0, %v2177
        %v2179 = vpop.f32.mrf.mxu0
        %v2180 = vadd.f32 0.0, %v2179
        %2181 = vmatmul.bf16.gmra.mxu0 %v2105
        %v2182 = vpop.f32.mrf.mxu0
        %v2183 = vadd.f32 0.0, %v2182
        %v2184 = vpop.f32.mrf.mxu0
        %v2185 = vadd.f32 0.0, %v2184
        %2186 = vmatmul.bf16.gmra.mxu0 %v2108
        %v2187 = vpop.f32.mrf.mxu0
        %v2188 = vadd.f32 0.0, %v2187
        %v2189 = vpop.f32.mrf.mxu0
        %v2190 = vadd.f32 0.0, %v2189
        %2191 = vmatmul.bf16.gmra.mxu0 %v2111
        %v2192 = vpop.f32.mrf.mxu0
        %v2193 = vadd.f32 0.0, %v2192
        %v2194 = vpop.f32.mrf.mxu0
        %v2195 = vadd.f32 0.0, %v2194
        %2196 = vmatmul.bf16.gmra.mxu0 %v2114
        %v2197 = vpop.f32.mrf.mxu0
        %v2198 = vadd.f32 0.0, %v2197
        %v2199 = vpop.f32.mrf.mxu0
        %v2200 = vadd.f32 0.0, %v2199
        %2201 = vmatmul.bf16.gmra.mxu0 %v2117
        %v2202 = vpop.f32.mrf.mxu0
        %v2203 = vadd.f32 0.0, %v2202
        %v2204 = vpop.f32.mrf.mxu0
        %v2205 = vadd.f32 0.0, %v2204
        %2206 = vmatmul.bf16.gmra.mxu0 %v2120
        %v2207 = vpop.f32.mrf.mxu0
        %v2208 = vadd.f32 0.0, %v2207
        %v2209 = vpop.f32.mrf.mxu0
        %v2210 = vadd.f32 0.0, %v2209
        %2211 = vmatmul.bf16.gmra.mxu0 %v2123
        %v2212 = vpop.f32.mrf.mxu0
        %v2213 = vadd.f32 0.0, %v2212
        %v2214 = vpop.f32.mrf.mxu0
        %v2215 = vadd.f32 0.0, %v2214
        %2216 = vdwg.mxu0
        %v2217 = vadd.f32 %v2005, %v2138
        %v2218 = vadd.f32 %v2006, %v2140
        %v2219 = vadd.f32 %v2007, %v2143
        %v2220 = vadd.f32 %v2008, %v2145
        %v2221 = vadd.f32 %v2009, %v2148
        %v2222 = vadd.f32 %v2010, %v2150
        %v2223 = vadd.f32 %v2011, %v2153
        %v2224 = vadd.f32 %v2012, %v2155
        %v2225 = vadd.f32 %v2013, %v2158
        %v2226 = vadd.f32 %v2014, %v2160
        %v2227 = vadd.f32 %v2015, %v2163
        %v2228 = vadd.f32 %v2016, %v2165
        %v2229 = vadd.f32 %v2017, %v2168
        %v2230 = vadd.f32 %v2018, %v2170
        %v2231 = vadd.f32 %v2019, %v2173
        %v2232 = vadd.f32 %v2020, %v2175
        %v2233 = vadd.f32 %v2021, %v2178
        %v2234 = vadd.f32 %v2022, %v2180
        %v2235 = vadd.f32 %v2023, %v2183
        %v2236 = vadd.f32 %v2024, %v2185
        %v2237 = vadd.f32 %v2025, %v2188
        %v2238 = vadd.f32 %v2026, %v2190
        %v2239 = vadd.f32 %v2027, %v2193
        %v2240 = vadd.f32 %v2028, %v2195
        %v2241 = vadd.f32 %v2029, %v2198
        %v2242 = vadd.f32 %v2030, %v2200
        %v2243 = vadd.f32 %v2031, %v2203
        %v2244 = vadd.f32 %v2032, %v2205
        %v2245 = vadd.f32 %v2033, %v2208
        %v2246 = vadd.f32 %v2034, %v2210
        %v2247 = vadd.f32 %v2035, %v2213
        %v2248 = vadd.f32 %v2036, %v2215
        %v2249 = vld [vmem:[%s2039] sm:$0xf]
        %v2250 = vld [vmem:[%s2039 + $0x4] sm:$0x1]
        %v2251 = vld [vmem:[%s2039 + $0x8] sm:$0xf]
        %v2252 = vld [vmem:[%s2039 + $0xc] sm:$0x1]
        %v2253 = vld [vmem:[%s2039 + $0x10] sm:$0xf]
        %v2254 = vld [vmem:[%s2039 + $0x14] sm:$0x1]
        %v2255 = vld [vmem:[%s2039 + $0x18] sm:$0xf]
        %v2256 = vld [vmem:[%s2039 + $0x1c] sm:$0x1]
        %v2257 = vld [vmem:[%s2039 + $0x20] sm:$0xf]
        %v2258 = vld [vmem:[%s2039 + $0x24] sm:$0x1]
        %v2259 = vld [vmem:[%s2039 + $0x28] sm:$0xf]
        %v2260 = vld [vmem:[%s2039 + $0x2c] sm:$0x1]
        %v2261 = vld [vmem:[%s2039 + $0x30] sm:$0xf]
        %v2262 = vld [vmem:[%s2039 + $0x34] sm:$0x1]
        %v2263 = vld [vmem:[%s2039 + $0x38] sm:$0xf]
        %v2264 = vld [vmem:[%s2039 + $0x3c] sm:$0x1]
        %v2266 = vshrl.u32 %v2249, 16
        %v2268 = vrot.slane %v2266, 4
        %v2269 = vshll.u32 %v2249, 16
        %v2271 = vrot.slane %v2269, 5
        %v2272 = vor.u32 %v2268, %v2271
        %v2273 = vrot.slane %v2272, 4
        %v2275 = vshll.u32 %v2250, 16
        %v2277 = vrot.slane %v2275, 5
        %v2278 = vsel %vm249, %v2273, %v2277
        %v2280 = vshrl.u32 %v2251, 16
        %v2282 = vrot.slane %v2280, 4
        %v2283 = vshll.u32 %v2251, 16
        %v2285 = vrot.slane %v2283, 5
        %v2286 = vor.u32 %v2282, %v2285
        %v2287 = vrot.slane %v2286, 4
        %v2289 = vshll.u32 %v2252, 16
        %v2291 = vrot.slane %v2289, 5
        %v2292 = vsel %vm249, %v2287, %v2291
        %v2294 = vshrl.u32 %v2253, 16
        %v2296 = vrot.slane %v2294, 4
        %v2297 = vshll.u32 %v2253, 16
        %v2299 = vrot.slane %v2297, 5
        %v2300 = vor.u32 %v2296, %v2299
        %v2301 = vrot.slane %v2300, 4
        %v2303 = vshll.u32 %v2254, 16
        %v2305 = vrot.slane %v2303, 5
        %v2306 = vsel %vm249, %v2301, %v2305
        %v2308 = vshrl.u32 %v2255, 16
        %v2310 = vrot.slane %v2308, 4
        %v2311 = vshll.u32 %v2255, 16
        %v2313 = vrot.slane %v2311, 5
        %v2314 = vor.u32 %v2310, %v2313
        %v2315 = vrot.slane %v2314, 4
        %v2317 = vshll.u32 %v2256, 16
        %v2319 = vrot.slane %v2317, 5
        %v2320 = vsel %vm249, %v2315, %v2319
        %v2322 = vshrl.u32 %v2257, 16
        %v2324 = vrot.slane %v2322, 4
        %v2325 = vshll.u32 %v2257, 16
        %v2327 = vrot.slane %v2325, 5
        %v2328 = vor.u32 %v2324, %v2327
        %v2329 = vrot.slane %v2328, 4
        %v2331 = vshll.u32 %v2258, 16
        %v2333 = vrot.slane %v2331, 5
        %v2334 = vsel %vm249, %v2329, %v2333
        %v2336 = vshrl.u32 %v2259, 16
        %v2338 = vrot.slane %v2336, 4
        %v2339 = vshll.u32 %v2259, 16
        %v2341 = vrot.slane %v2339, 5
        %v2342 = vor.u32 %v2338, %v2341
        %v2343 = vrot.slane %v2342, 4
        %v2345 = vshll.u32 %v2260, 16
        %v2347 = vrot.slane %v2345, 5
        %v2348 = vsel %vm249, %v2343, %v2347
        %v2350 = vshrl.u32 %v2261, 16
        %v2352 = vrot.slane %v2350, 4
        %v2353 = vshll.u32 %v2261, 16
        %v2355 = vrot.slane %v2353, 5
        %v2356 = vor.u32 %v2352, %v2355
        %v2357 = vrot.slane %v2356, 4
        %v2359 = vshll.u32 %v2262, 16
        %v2361 = vrot.slane %v2359, 5
        %v2362 = vsel %vm249, %v2357, %v2361
        %v2364 = vshrl.u32 %v2263, 16
        %v2366 = vrot.slane %v2364, 4
        %v2367 = vshll.u32 %v2263, 16
        %v2369 = vrot.slane %v2367, 5
        %v2370 = vor.u32 %v2366, %v2369
        %v2371 = vrot.slane %v2370, 4
        %v2373 = vshll.u32 %v2264, 16
        %v2375 = vrot.slane %v2373, 5
        %v2376 = vsel %vm249, %v2371, %v2375
        %s2377 = scalar_lea.vmem %s1, 14
        %v2378 = vld [vmem:[%s2377] sm:$0x3]
        %v2379 = vunpack.c.l.b16 %v2278
        %v2380 = vunpack.c.l.b16 %v2292
        %v2381 = vunpack.c.l.b16 %v2306
        %v2382 = vunpack.c.l.b16 %v2320
        %v2383 = vunpack.c.l.b16 %v2334
        %v2384 = vunpack.c.l.b16 %v2348
        %v2385 = vunpack.c.l.b16 %v2362
        %v2386 = vunpack.c.l.b16 %v2376
        %v2387 = vpack.c.b16 %v2380, %v2379
        %v2388 = vpack.c.b16 %v2382, %v2381
        %v2389 = vpack.c.b16 %v2384, %v2383
        %v2390 = vpack.c.b16 %v2386, %v2385
        %v2392 = vsel %vm540, %v2387, 0
        %v2395 = vsel %vm540, %v2388, 0
        %v2398 = vsel %vm540, %v2389, 0
        %v2401 = vsel %vm540, %v2390, 0
        %v2404 = vsel %vm589, %v2378, 0
        %2406 = vmatpush.bf16.msra.mxu0 0
        %2407 = vmatpush.bf16.msra.mxu0 0
        %2408 = vmatpush.bf16.msra.mxu0 0
        %2409 = vmatpush.bf16.msra.mxu0 0
        %2410 = vmatpush.bf16.msra.mxu0 0
        %2411 = vmatpush.bf16.msra.mxu0 0
        %2412 = vmatpush.bf16.msra.mxu0 0
        %2413 = vmatpush.bf16.msra.mxu0 %v2404
        %2414 = vmatmul.bf16.gmra.mxu0 %v1346
        %v2415 = vpop.f32.mrf.mxu0
        %v2416 = vadd.f32 0.0, %v2415
        %v2417 = vpop.f32.mrf.mxu0
        %v2418 = vadd.f32 0.0, %v2417
        %2419 = vmatmul.bf16.gmra.mxu0 %v1349
        %v2420 = vpop.f32.mrf.mxu0
        %v2421 = vadd.f32 0.0, %v2420
        %v2422 = vpop.f32.mrf.mxu0
        %v2423 = vadd.f32 0.0, %v2422
        %2424 = vmatmul.bf16.gmra.mxu0 %v1352
        %v2425 = vpop.f32.mrf.mxu0
        %v2426 = vadd.f32 0.0, %v2425
        %v2427 = vpop.f32.mrf.mxu0
        %v2428 = vadd.f32 0.0, %v2427
        %2429 = vmatmul.bf16.gmra.mxu0 %v1355
        %v2430 = vpop.f32.mrf.mxu0
        %v2431 = vadd.f32 0.0, %v2430
        %v2432 = vpop.f32.mrf.mxu0
        %v2433 = vadd.f32 0.0, %v2432
        %2434 = vmatmul.bf16.gmra.mxu0 %v1624
        %v2435 = vpop.f32.mrf.mxu0
        %v2436 = vadd.f32 0.0, %v2435
        %v2437 = vpop.f32.mrf.mxu0
        %v2438 = vadd.f32 0.0, %v2437
        %2439 = vmatmul.bf16.gmra.mxu0 %v1627
        %v2440 = vpop.f32.mrf.mxu0
        %v2441 = vadd.f32 0.0, %v2440
        %v2442 = vpop.f32.mrf.mxu0
        %v2443 = vadd.f32 0.0, %v2442
        %2444 = vmatmul.bf16.gmra.mxu0 %v1630
        %v2445 = vpop.f32.mrf.mxu0
        %v2446 = vadd.f32 0.0, %v2445
        %v2447 = vpop.f32.mrf.mxu0
        %v2448 = vadd.f32 0.0, %v2447
        %2449 = vmatmul.bf16.gmra.mxu0 %v1633
        %v2450 = vpop.f32.mrf.mxu0
        %v2451 = vadd.f32 0.0, %v2450
        %v2452 = vpop.f32.mrf.mxu0
        %v2453 = vadd.f32 0.0, %v2452
        %2454 = vmatmul.bf16.gmra.mxu0 %v2114
        %v2455 = vpop.f32.mrf.mxu0
        %v2456 = vadd.f32 0.0, %v2455
        %v2457 = vpop.f32.mrf.mxu0
        %v2458 = vadd.f32 0.0, %v2457
        %2459 = vmatmul.bf16.gmra.mxu0 %v2117
        %v2460 = vpop.f32.mrf.mxu0
        %v2461 = vadd.f32 0.0, %v2460
        %v2462 = vpop.f32.mrf.mxu0
        %v2463 = vadd.f32 0.0, %v2462
        %2464 = vmatmul.bf16.gmra.mxu0 %v2120
        %v2465 = vpop.f32.mrf.mxu0
        %v2466 = vadd.f32 0.0, %v2465
        %v2467 = vpop.f32.mrf.mxu0
        %v2468 = vadd.f32 0.0, %v2467
        %2469 = vmatmul.bf16.gmra.mxu0 %v2123
        %v2470 = vpop.f32.mrf.mxu0
        %v2471 = vadd.f32 0.0, %v2470
        %v2472 = vpop.f32.mrf.mxu0
        %v2473 = vadd.f32 0.0, %v2472
        %2474 = vmatmul.bf16.gmra.mxu0 %v2392
        %v2475 = vpop.f32.mrf.mxu0
        %v2476 = vadd.f32 0.0, %v2475
        %v2477 = vpop.f32.mrf.mxu0
        %v2478 = vadd.f32 0.0, %v2477
        %2479 = vmatmul.bf16.gmra.mxu0 %v2395
        %v2480 = vpop.f32.mrf.mxu0
        %v2481 = vadd.f32 0.0, %v2480
        %v2482 = vpop.f32.mrf.mxu0
        %v2483 = vadd.f32 0.0, %v2482
        %2484 = vmatmul.bf16.gmra.mxu0 %v2398
        %v2485 = vpop.f32.mrf.mxu0
        %v2486 = vadd.f32 0.0, %v2485
        %v2487 = vpop.f32.mrf.mxu0
        %v2488 = vadd.f32 0.0, %v2487
        %2489 = vmatmul.bf16.gmra.mxu0 %v2401
        %v2490 = vpop.f32.mrf.mxu0
        %v2491 = vadd.f32 0.0, %v2490
        %v2492 = vpop.f32.mrf.mxu0
        %v2493 = vadd.f32 0.0, %v2492
        %2494 = vdwg.mxu0
        %v2495 = vadd.f32 %v2217, %v2416
        %v2496 = vadd.f32 %v2218, %v2418
        %v2497 = vadd.f32 %v2219, %v2421
        %v2498 = vadd.f32 %v2220, %v2423
        %v2499 = vadd.f32 %v2221, %v2426
        %v2500 = vadd.f32 %v2222, %v2428
        %v2501 = vadd.f32 %v2223, %v2431
        %v2502 = vadd.f32 %v2224, %v2433
        %v2503 = vadd.f32 %v2225, %v2436
        %v2504 = vadd.f32 %v2226, %v2438
        %v2505 = vadd.f32 %v2227, %v2441
        %v2506 = vadd.f32 %v2228, %v2443
        %v2507 = vadd.f32 %v2229, %v2446
        %v2508 = vadd.f32 %v2230, %v2448
        %v2509 = vadd.f32 %v2231, %v2451
        %v2510 = vadd.f32 %v2232, %v2453
        %v2511 = vadd.f32 %v2233, %v2456
        %v2512 = vadd.f32 %v2234, %v2458
        %v2513 = vadd.f32 %v2235, %v2461
        %v2514 = vadd.f32 %v2236, %v2463
        %v2515 = vadd.f32 %v2237, %v2466
        %v2516 = vadd.f32 %v2238, %v2468
        %v2517 = vadd.f32 %v2239, %v2471
        %v2518 = vadd.f32 %v2240, %v2473
        %v2519 = vadd.f32 %v2241, %v2476
        %v2520 = vadd.f32 %v2242, %v2478
        %v2521 = vadd.f32 %v2243, %v2481
        %v2522 = vadd.f32 %v2244, %v2483
        %v2523 = vadd.f32 %v2245, %v2486
        %v2524 = vadd.f32 %v2246, %v2488
        %v2525 = vadd.f32 %v2247, %v2491
        %v2526 = vadd.f32 %v2248, %v2493
        %v2527 = vld [vmem:[%s2050] sm:$0xf]
        %v2528 = vld [vmem:[%s2050 + $0x4] sm:$0x1]
        %v2529 = vld [vmem:[%s2050 + $0x8] sm:$0xf]
        %v2530 = vld [vmem:[%s2050 + $0xc] sm:$0x1]
        %v2531 = vld [vmem:[%s2050 + $0x10] sm:$0xf]
        %v2532 = vld [vmem:[%s2050 + $0x14] sm:$0x1]
        %v2533 = vld [vmem:[%s2050 + $0x18] sm:$0xf]
        %v2534 = vld [vmem:[%s2050 + $0x1c] sm:$0x1]
        %v2535 = vld [vmem:[%s2050 + $0x20] sm:$0xf]
        %v2536 = vld [vmem:[%s2050 + $0x24] sm:$0x1]
        %v2537 = vld [vmem:[%s2050 + $0x28] sm:$0xf]
        %v2538 = vld [vmem:[%s2050 + $0x2c] sm:$0x1]
        %v2539 = vld [vmem:[%s2050 + $0x30] sm:$0xf]
        %v2540 = vld [vmem:[%s2050 + $0x34] sm:$0x1]
        %v2541 = vld [vmem:[%s2050 + $0x38] sm:$0xf]
        %v2542 = vld [vmem:[%s2050 + $0x3c] sm:$0x1]
        %v2544 = vshrl.u32 %v2527, 16
        %v2546 = vrot.slane %v2544, 4
        %v2547 = vshll.u32 %v2527, 16
        %v2549 = vrot.slane %v2547, 5
        %v2550 = vor.u32 %v2546, %v2549
        %v2551 = vrot.slane %v2550, 4
        %v2553 = vshll.u32 %v2528, 16
        %v2555 = vrot.slane %v2553, 5
        %v2556 = vsel %vm249, %v2551, %v2555
        %v2558 = vshrl.u32 %v2529, 16
        %v2560 = vrot.slane %v2558, 4
        %v2561 = vshll.u32 %v2529, 16
        %v2563 = vrot.slane %v2561, 5
        %v2564 = vor.u32 %v2560, %v2563
        %v2565 = vrot.slane %v2564, 4
        %v2567 = vshll.u32 %v2530, 16
        %v2569 = vrot.slane %v2567, 5
        %v2570 = vsel %vm249, %v2565, %v2569
        %v2572 = vshrl.u32 %v2531, 16
        %v2574 = vrot.slane %v2572, 4
        %v2575 = vshll.u32 %v2531, 16
        %v2577 = vrot.slane %v2575, 5
        %v2578 = vor.u32 %v2574, %v2577
        %v2579 = vrot.slane %v2578, 4
        %v2581 = vshll.u32 %v2532, 16
        %v2583 = vrot.slane %v2581, 5
        %v2584 = vsel %vm249, %v2579, %v2583
        %v2586 = vshrl.u32 %v2533, 16
        %v2588 = vrot.slane %v2586, 4
        %v2589 = vshll.u32 %v2533, 16
        %v2591 = vrot.slane %v2589, 5
        %v2592 = vor.u32 %v2588, %v2591
        %v2593 = vrot.slane %v2592, 4
        %v2595 = vshll.u32 %v2534, 16
        %v2597 = vrot.slane %v2595, 5
        %v2598 = vsel %vm249, %v2593, %v2597
        %v2600 = vshrl.u32 %v2535, 16
        %v2602 = vrot.slane %v2600, 4
        %v2603 = vshll.u32 %v2535, 16
        %v2605 = vrot.slane %v2603, 5
        %v2606 = vor.u32 %v2602, %v2605
        %v2607 = vrot.slane %v2606, 4
        %v2609 = vshll.u32 %v2536, 16
        %v2611 = vrot.slane %v2609, 5
        %v2612 = vsel %vm249, %v2607, %v2611
        %v2614 = vshrl.u32 %v2537, 16
        %v2616 = vrot.slane %v2614, 4
        %v2617 = vshll.u32 %v2537, 16
        %v2619 = vrot.slane %v2617, 5
        %v2620 = vor.u32 %v2616, %v2619
        %v2621 = vrot.slane %v2620, 4
        %v2623 = vshll.u32 %v2538, 16
        %v2625 = vrot.slane %v2623, 5
        %v2626 = vsel %vm249, %v2621, %v2625
        %v2628 = vshrl.u32 %v2539, 16
        %v2630 = vrot.slane %v2628, 4
        %v2631 = vshll.u32 %v2539, 16
        %v2633 = vrot.slane %v2631, 5
        %v2634 = vor.u32 %v2630, %v2633
        %v2635 = vrot.slane %v2634, 4
        %v2637 = vshll.u32 %v2540, 16
        %v2639 = vrot.slane %v2637, 5
        %v2640 = vsel %vm249, %v2635, %v2639
        %v2642 = vshrl.u32 %v2541, 16
        %v2644 = vrot.slane %v2642, 4
        %v2645 = vshll.u32 %v2541, 16
        %v2647 = vrot.slane %v2645, 5
        %v2648 = vor.u32 %v2644, %v2647
        %v2649 = vrot.slane %v2648, 4
        %v2651 = vshll.u32 %v2542, 16
        %v2653 = vrot.slane %v2651, 5
        %v2654 = vsel %vm249, %v2649, %v2653
        %s2655 = scalar_lea.vmem %s1, 16
        %v2656 = vld [vmem:[%s2655] sm:$0x3]
        %v2657 = vunpack.c.l.b16 %v2556
        %v2658 = vunpack.c.l.b16 %v2570
        %v2659 = vunpack.c.l.b16 %v2584
        %v2660 = vunpack.c.l.b16 %v2598
        %v2661 = vunpack.c.l.b16 %v2612
        %v2662 = vunpack.c.l.b16 %v2626
        %v2663 = vunpack.c.l.b16 %v2640
        %v2664 = vunpack.c.l.b16 %v2654
        %v2665 = vpack.c.b16 %v2658, %v2657
        %v2666 = vpack.c.b16 %v2660, %v2659
        %v2667 = vpack.c.b16 %v2662, %v2661
        %v2668 = vpack.c.b16 %v2664, %v2663
        %v2670 = vsel %vm540, %v2665, 0
        %v2673 = vsel %vm540, %v2666, 0
        %v2676 = vsel %vm540, %v2667, 0
        %v2679 = vsel %vm540, %v2668, 0
        %v2682 = vsel %vm589, %v2656, 0
        %2684 = vmatpush.bf16.msra.mxu0 0
        %2685 = vmatpush.bf16.msra.mxu0 0
        %2686 = vmatpush.bf16.msra.mxu0 0
        %2687 = vmatpush.bf16.msra.mxu0 0
        %2688 = vmatpush.bf16.msra.mxu0 0
        %2689 = vmatpush.bf16.msra.mxu0 0
        %2690 = vmatpush.bf16.msra.mxu0 0
        %2691 = vmatpush.bf16.msra.mxu0 %v2682
        %2692 = vmatmul.bf16.gmra.mxu0 %v1624
        %v2693 = vpop.f32.mrf.mxu0
        %v2694 = vadd.f32 0.0, %v2693
        %v2695 = vpop.f32.mrf.mxu0
        %v2696 = vadd.f32 0.0, %v2695
        %2697 = vmatmul.bf16.gmra.mxu0 %v1627
        %v2698 = vpop.f32.mrf.mxu0
        %v2699 = vadd.f32 0.0, %v2698
        %v2700 = vpop.f32.mrf.mxu0
        %v2701 = vadd.f32 0.0, %v2700
        %2702 = vmatmul.bf16.gmra.mxu0 %v1630
        %v2703 = vpop.f32.mrf.mxu0
        %v2704 = vadd.f32 0.0, %v2703
        %v2705 = vpop.f32.mrf.mxu0
        %v2706 = vadd.f32 0.0, %v2705
        %2707 = vmatmul.bf16.gmra.mxu0 %v1633
        %v2708 = vpop.f32.mrf.mxu0
        %v2709 = vadd.f32 0.0, %v2708
        %v2710 = vpop.f32.mrf.mxu0
        %v2711 = vadd.f32 0.0, %v2710
        %2712 = vmatmul.bf16.gmra.mxu0 %v1902
        %v2713 = vpop.f32.mrf.mxu0
        %v2714 = vadd.f32 0.0, %v2713
        %v2715 = vpop.f32.mrf.mxu0
        %v2716 = vadd.f32 0.0, %v2715
        %2717 = vmatmul.bf16.gmra.mxu0 %v1905
        %v2718 = vpop.f32.mrf.mxu0
        %v2719 = vadd.f32 0.0, %v2718
        %v2720 = vpop.f32.mrf.mxu0
        %v2721 = vadd.f32 0.0, %v2720
        %2722 = vmatmul.bf16.gmra.mxu0 %v1908
        %v2723 = vpop.f32.mrf.mxu0
        %v2724 = vadd.f32 0.0, %v2723
        %v2725 = vpop.f32.mrf.mxu0
        %v2726 = vadd.f32 0.0, %v2725
        %2727 = vmatmul.bf16.gmra.mxu0 %v1911
        %v2728 = vpop.f32.mrf.mxu0
        %v2729 = vadd.f32 0.0, %v2728
        %v2730 = vpop.f32.mrf.mxu0
        %v2731 = vadd.f32 0.0, %v2730
        %2732 = vmatmul.bf16.gmra.mxu0 %v2392
        %v2733 = vpop.f32.mrf.mxu0
        %v2734 = vadd.f32 0.0, %v2733
        %v2735 = vpop.f32.mrf.mxu0
        %v2736 = vadd.f32 0.0, %v2735
        %2737 = vmatmul.bf16.gmra.mxu0 %v2395
        %v2738 = vpop.f32.mrf.mxu0
        %v2739 = vadd.f32 0.0, %v2738
        %v2740 = vpop.f32.mrf.mxu0
        %v2741 = vadd.f32 0.0, %v2740
        %2742 = vmatmul.bf16.gmra.mxu0 %v2398
        %v2743 = vpop.f32.mrf.mxu0
        %v2744 = vadd.f32 0.0, %v2743
        %v2745 = vpop.f32.mrf.mxu0
        %v2746 = vadd.f32 0.0, %v2745
        %2747 = vmatmul.bf16.gmra.mxu0 %v2401
        %v2748 = vpop.f32.mrf.mxu0
        %v2749 = vadd.f32 0.0, %v2748
        %v2750 = vpop.f32.mrf.mxu0
        %v2751 = vadd.f32 0.0, %v2750
        %2752 = vmatmul.bf16.gmra.mxu0 %v2670
        %v2753 = vpop.f32.mrf.mxu0
        %v2754 = vadd.f32 0.0, %v2753
        %v2755 = vpop.f32.mrf.mxu0
        %v2756 = vadd.f32 0.0, %v2755
        %2757 = vmatmul.bf16.gmra.mxu0 %v2673
        %v2758 = vpop.f32.mrf.mxu0
        %v2759 = vadd.f32 0.0, %v2758
        %v2760 = vpop.f32.mrf.mxu0
        %v2761 = vadd.f32 0.0, %v2760
        %2762 = vmatmul.bf16.gmra.mxu0 %v2676
        %v2763 = vpop.f32.mrf.mxu0
        %v2764 = vadd.f32 0.0, %v2763
        %v2765 = vpop.f32.mrf.mxu0
        %v2766 = vadd.f32 0.0, %v2765
        %2767 = vmatmul.bf16.gmra.mxu0 %v2679
        %v2768 = vpop.f32.mrf.mxu0
        %v2769 = vadd.f32 0.0, %v2768
        %v2770 = vpop.f32.mrf.mxu0
        %v2771 = vadd.f32 0.0, %v2770
        %2772 = vdwg.mxu0
        %v2773 = vadd.f32 %v2495, %v2694
        %v2774 = vadd.f32 %v2496, %v2696
        %v2775 = vadd.f32 %v2497, %v2699
        %v2776 = vadd.f32 %v2498, %v2701
        %v2777 = vadd.f32 %v2499, %v2704
        %v2778 = vadd.f32 %v2500, %v2706
        %v2779 = vadd.f32 %v2501, %v2709
        %v2780 = vadd.f32 %v2502, %v2711
        %v2781 = vadd.f32 %v2503, %v2714
        %v2782 = vadd.f32 %v2504, %v2716
        %v2783 = vadd.f32 %v2505, %v2719
        %v2784 = vadd.f32 %v2506, %v2721
        %v2785 = vadd.f32 %v2507, %v2724
        %v2786 = vadd.f32 %v2508, %v2726
        %v2787 = vadd.f32 %v2509, %v2729
        %v2788 = vadd.f32 %v2510, %v2731
        %v2789 = vadd.f32 %v2511, %v2734
        %v2790 = vadd.f32 %v2512, %v2736
        %v2791 = vadd.f32 %v2513, %v2739
        %v2792 = vadd.f32 %v2514, %v2741
        %v2793 = vadd.f32 %v2515, %v2744
        %v2794 = vadd.f32 %v2516, %v2746
        %v2795 = vadd.f32 %v2517, %v2749
        %v2796 = vadd.f32 %v2518, %v2751
        %v2797 = vadd.f32 %v2519, %v2754
        %v2798 = vadd.f32 %v2520, %v2756
        %v2799 = vadd.f32 %v2521, %v2759
        %v2800 = vadd.f32 %v2522, %v2761
        %v2801 = vadd.f32 %v2523, %v2764
        %v2802 = vadd.f32 %v2524, %v2766
        %v2803 = vadd.f32 %v2525, %v2769
        %v2804 = vadd.f32 %v2526, %v2771
        %v2805 = vmax.f32 %v2773, %v2781
        %v2806 = vmax.f32 %v2774, %v2782
        %v2807 = vmax.f32 %v2775, %v2783
        %v2808 = vmax.f32 %v2776, %v2784
        %v2809 = vmax.f32 %v2777, %v2785
        %v2810 = vmax.f32 %v2778, %v2786
        %v2811 = vmax.f32 %v2779, %v2787
        %v2812 = vmax.f32 %v2780, %v2788
        %v2813 = vmax.f32 %v2789, %v2797
        %v2814 = vmax.f32 %v2790, %v2798
        %v2815 = vmax.f32 %v2791, %v2799
        %v2816 = vmax.f32 %v2792, %v2800
        %v2817 = vmax.f32 %v2793, %v2801
        %v2818 = vmax.f32 %v2794, %v2802
        %v2819 = vmax.f32 %v2795, %v2803
        %v2820 = vmax.f32 %v2796, %v2804
        %v2821 = vmax.f32 %v2805, %v2813
        %v2822 = vmax.f32 %v2806, %v2814
        %v2823 = vmax.f32 %v2807, %v2815
        %v2824 = vmax.f32 %v2808, %v2816
        %v2825 = vmax.f32 %v2809, %v2817
        %v2826 = vmax.f32 %v2810, %v2818
        %v2827 = vmax.f32 %v2811, %v2819
        %v2828 = vmax.f32 %v2812, %v2820
        %v2829 = vld [vmem:[%s2] sm:$0x1]
        %v2831 = vperm.slane %v2829, 0
        %v2833 = vadd.f32 %v2821, %v2831
        %v2834 = vadd.f32 %v2822, %v2831
        %v2835 = vadd.f32 %v2823, %v2831
        %v2836 = vadd.f32 %v2824, %v2831
        %v2837 = vadd.f32 %v2825, %v2831
        %v2838 = vadd.f32 %v2826, %v2831
        %v2839 = vadd.f32 %v2827, %v2831
        %v2840 = vadd.f32 %v2828, %v2831
        %v2841 = vmax.f32 %v2833, 0.0
        %v2842 = vmax.f32 %v2834, 0.0
        %v2843 = vmax.f32 %v2835, 0.0
        %v2844 = vmax.f32 %v2836, 0.0
        %v2845 = vmax.f32 %v2837, 0.0
        %v2846 = vmax.f32 %v2838, 0.0
        %v2847 = vmax.f32 %v2839, 0.0
        %v2848 = vmax.f32 %v2840, 0.0
        %2849 = vst [vmem:[%s177] sm:$0xff] %v2841
        %2850 = vst [vmem:[%s177 + $0x8] sm:$0xff] %v2842
        %2851 = vst [vmem:[%s177 + $0x10] sm:$0xff] %v2843
        %2852 = vst [vmem:[%s177 + $0x18] sm:$0xff] %v2844
        %2853 = vst [vmem:[%s177 + $0x20] sm:$0xff] %v2845
        %2854 = vst [vmem:[%s177 + $0x28] sm:$0xff] %v2846
        %2855 = vst [vmem:[%s177 + $0x30] sm:$0xff] %v2847
        %2856 = vst [vmem:[%s177 + $0x38] sm:$0xff] %v2848
        %s2857 = sand.u32 %s107, 1
        %s2858 = scalar_lea.sflag [#allocation3], %s2857
        %s2859 = sand.u32 %s107, 1
        %s2860 = smul.addr %s2859, 64
        %s2861 = scalar_lea.vmem [#allocation2], %s2860
        // Predicated region
        $region33: #{tpu_custom_call.1} parent=31 // pred_check
          %p2862 = pneg %p117
        $region34: #{tpu_custom_call.1} parent=31 // pred_check_branch
          %2864 = sbr.rel (%p2862) target = $region36
        $region35: #{tpu_custom_call.1} parent=31 // pred_region
          %s2865 = smul.u32 8, %s22
          %2867 = vsyncadd %s2858, 0
          %s2868 = smul.addr %s21, 8
          %s2869 = sadd.s32 %s2865, %s2868
          %s2870 = smul.addr %s2869, 8
          %s2871 = scalar_lea.hbm %s3, %s2870
          %s2872 = sshll.u32 %s2861, 4
          %s2873 = int_to_ptr.vmem [resolvable:$true] %s2872
          %s2874 = sshll.u32 %s2871, 4
          %s2875 = int_to_ptr.hbm [resolvable:$true] %s2874
          %2880 = dma.vmem_to_hbm [thread:$0]  %s2873, 1024, %s2875, %s2858, 128, 128, 8
        $region36: #{tpu_custom_call.1} parent=31 // pred_fallthru
          _
      $region32: #{tpu_custom_call.1} parent=5 // pred_fallthru
        _
      %p2881 = scmp.le.s32.totalorder 2, %s12
      // Predicated region
      $region37: #{tpu_custom_call.1} parent=5 // pred_check
        %p2882 = pneg %p2881
      $region38: #{tpu_custom_call.1} parent=5 // pred_check_branch
        %2884 = sbr.rel (%p2882) target = $region40
      $region39: #{tpu_custom_call.1} parent=5 // pred_region
        %s2885 = ssub.s32 %s12, 2
        // Predicated region
        $region41: #{tpu_custom_call.1} parent=39 // pred_check
          %p2886 = pneg %p123
        $region42: #{tpu_custom_call.1} parent=39 // pred_check_branch
          %2888 = sbr.rel (%p2886) target = $region44
        $region43: #{tpu_custom_call.1} parent=39 // pred_region
          %s2889 = sand.u32 %s108, 1
          %s2890 = scalar_lea.sflag [#allocation3], %s2889
          %s2891 = sand.u32 %s108, 1
          %s2892 = smul.addr %s2891, 64
          %s2893 = scalar_lea.vmem [#allocation2], %s2892
          %2895 = dma.done %s2890, 1024
        $region44: #{tpu_custom_call.1} parent=39 // pred_fallthru
          _
      $region40: #{tpu_custom_call.1} parent=5 // pred_fallthru
        _
    $region6: #{tpu_custom_call.1} parent=1 // loop_footer
      %s16 = sadd.s32 1, %s12
    $region7: #{tpu_custom_call.1} parent=1 // loop_footer_branch
      %11 = sbr.rel target = $region3
    $region8: #{tpu_custom_call.1} parent=1 // loop_exit
      _
    %2896 = vsyncpa [#allocation3], 1
    %s2897 = scalar_lea.sflag [#allocation3], 1
    %2898 = vsyncpa %s2897, 1

</llo_original>
